<compile_context>
chip_gen: v5e
topology: v5e:2x2
jax: 0.10.0
libtpu: 0.0.40
codegen_flags: <defaults>
</compile_context>

<pallas_src>
import jax
import jax.numpy as jnp
from jax import lax
from jax.experimental import pallas as pl
from jax.experimental.pallas import tpu as pltpu

EPS = 1e-5


def downlayer_kernel(x_ref, w1_ref, s1_ref, b1_ref, w2_ref, s2_ref, b2_ref,
                     o_ref, pad1_ref, pad2_ref):
    H2, Wp, Cin2 = x_ref.shape          # (2*Hp, Wp, 2*Cin), bf16
    Cin = Cin2 // 2
    Hp = H2 // 2
    C1 = w1_ref.shape[-1]
    C2 = w2_ref.shape[-1]

    # ---- MaxPool2d(kernel_size=2) ------------------------------------------
    # Width pairs were folded into the channel/lane dim by a free wrapper
    # reshape; height pairs are handled by a leading-dim split (cheap).
    x = x_ref[...]                                          # (2Hp, Wp, 2Cin)
    xw = jnp.maximum(x[:, :, :Cin], x[:, :, Cin:])          # pool over width
    xh = xw.reshape(Hp, 2, Wp, Cin)                         # split leading dim
    pooled = jnp.maximum(xh[:, 0], xh[:, 1])                # (Hp, Wp, Cin) bf16

    # ---- Zero only the 1-pixel border strips of the padded scratch planes ---
    # (interior is fully overwritten every grid step; full-plane zeroing would
    #  waste vst bandwidth). Done every step -> safe under megacore sharding.
    pad1_ref[0:1, :, :] = jnp.zeros((1, Wp + 2, Cin), jnp.bfloat16)
    pad1_ref[Hp + 1:Hp + 2, :, :] = jnp.zeros((1, Wp + 2, Cin), jnp.bfloat16)
    pad1_ref[1:Hp + 1, 0:1, :] = jnp.zeros((Hp, 1, Cin), jnp.bfloat16)
    pad1_ref[1:Hp + 1, Wp + 1:Wp + 2, :] = jnp.zeros((Hp, 1, Cin), jnp.bfloat16)

    pad2_ref[0:1, :, :] = jnp.zeros((1, Wp + 2, C1), jnp.bfloat16)
    pad2_ref[Hp + 1:Hp + 2, :, :] = jnp.zeros((1, Wp + 2, C1), jnp.bfloat16)
    pad2_ref[1:Hp + 1, 0:1, :] = jnp.zeros((Hp, 1, C1), jnp.bfloat16)
    pad2_ref[1:Hp + 1, Wp + 1:Wp + 2, :] = jnp.zeros((Hp, 1, C1), jnp.bfloat16)

    # ---- Conv1 (3x3, pad=1): im2col -> one K=9*Cin bf16 MXU matmul ----------
    pad1_ref[1:Hp + 1, 1:Wp + 1, :] = pooled
    taps1 = [pad1_ref[dy:dy + Hp, dx:dx + Wp, :]
             for dy in range(3) for dx in range(3)]
    a1 = jnp.concatenate(taps1, axis=-1).reshape(Hp * Wp, 9 * Cin)   # bf16
    acc1 = jnp.dot(a1, w1_ref[...], preferred_element_type=jnp.float32)
    h1 = jnp.maximum(acc1 * s1_ref[...] + b1_ref[...], 0.0)          # (Hp*Wp, C1) f32

    # ---- Conv2 (3x3, pad=1): same trick on h1 -------------------------------
    pad2_ref[1:Hp + 1, 1:Wp + 1, :] = h1.reshape(Hp, Wp, C1).astype(jnp.bfloat16)
    taps2 = [pad2_ref[dy:dy + Hp, dx:dx + Wp, :]
             for dy in range(3) for dx in range(3)]
    a2 = jnp.concatenate(taps2, axis=-1).reshape(Hp * Wp, 9 * C1)    # bf16
    acc2 = jnp.dot(a2, w2_ref[...], preferred_element_type=jnp.float32)
    h2 = jnp.maximum(acc2 * s2_ref[...] + b2_ref[...], 0.0)          # (Hp*Wp, C2)

    o_ref[...] = h2.astype(o_ref.dtype)


def downlayer_forward(x_nchw, params):
    B, Cin, H, W = x_nchw.shape
    Hp, Wp = H // 2, W // 2
    C1 = params["w1_k"].shape[-1]
    C2 = params["w2_k"].shape[-1]

    # NCHW -> NHWC glue + single bf16 cast (halves kernel DMA bytes), then a
    # FREE row-major reshape folding the width-pool pair into channels.
    x_nhwc = jnp.transpose(x_nchw, (0, 2, 3, 1)).astype(jnp.bfloat16)
    x_k = x_nhwc.reshape(B, H, Wp, 2 * Cin)

    out = pl.pallas_call(
        downlayer_kernel,
        out_shape=jax.ShapeDtypeStruct((B, Hp * Wp, C2), jnp.float32),
        grid=(B,),
        in_specs=[
            pl.BlockSpec((None, H, Wp, 2 * Cin), lambda b: (b, 0, 0, 0)),
            pl.BlockSpec((9 * Cin, C1), lambda b: (0, 0)),
            pl.BlockSpec((1, C1), lambda b: (0, 0)),
            pl.BlockSpec((1, C1), lambda b: (0, 0)),
            pl.BlockSpec((9 * C1, C2), lambda b: (0, 0)),
            pl.BlockSpec((1, C2), lambda b: (0, 0)),
            pl.BlockSpec((1, C2), lambda b: (0, 0)),
        ],
        out_specs=pl.BlockSpec((None, Hp * Wp, C2), lambda b: (b, 0, 0)),
        scratch_shapes=[
            pltpu.VMEM((Hp + 2, Wp + 2, Cin), jnp.bfloat16),
            pltpu.VMEM((Hp + 2, Wp + 2, C1), jnp.bfloat16),
        ],
        compiler_params=pltpu.CompilerParams(
            dimension_semantics=("parallel",)),
    )(x_k, params["w1_k"], params["s1"], params["b1"],
      params["w2_k"], params["s2"], params["b2"])

    # (B, Hp*Wp, C2) -> (B, Hp, Wp, C2) is free; transpose back to NCHW (glue).
    return jnp.transpose(out.reshape(B, Hp, Wp, C2), (0, 3, 1, 2))


def _fold_bn(conv_b, gamma, beta, mean, var):
    scale = gamma / jnp.sqrt(var + EPS)
    bias = (conv_b - mean) * scale + beta
    return scale[None, :], bias[None, :]


def init_params(key, in_ch, out_ch):
    ks = jax.random.split(key, 12)
    # Layer 1 (conv in_ch -> out_ch, OIHW like PyTorch) + BN params.
    w1 = jax.random.normal(ks[0], (out_ch, in_ch, 3, 3), jnp.float32) * 0.1
    cb1 = jax.random.normal(ks[1], (out_ch,), jnp.float32) * 0.05
    g1 = 1.0 + 0.1 * jax.random.normal(ks[2], (out_ch,), jnp.float32)
    beta1 = 0.1 * jax.random.normal(ks[3], (out_ch,), jnp.float32)
    m1 = 0.1 * jax.random.normal(ks[4], (out_ch,), jnp.float32)
    v1 = 0.9 + 0.2 * jax.random.uniform(ks[5], (out_ch,), jnp.float32)
    # Layer 2 (conv out_ch -> out_ch) + BN params.
    w2 = jax.random.normal(ks[6], (out_ch, out_ch, 3, 3), jnp.float32) * 0.1
    cb2 = jax.random.normal(ks[7], (out_ch,), jnp.float32) * 0.05
    g2 = 1.0 + 0.1 * jax.random.normal(ks[8], (out_ch,), jnp.float32)
    beta2 = 0.1 * jax.random.normal(ks[9], (out_ch,), jnp.float32)
    m2 = 0.1 * jax.random.normal(ks[10], (out_ch,), jnp.float32)
    v2 = 0.9 + 0.2 * jax.random.uniform(ks[11], (out_ch,), jnp.float32)

    s1, b1 = _fold_bn(cb1, g1, beta1, m1, v1)
    s2, b2 = _fold_bn(cb2, g2, beta2, m2, v2)

    return dict(
        # im2col-layout weights (dy,dx,Cin major -> K), pre-cast to bf16.
        w1_k=jnp.transpose(w1, (2, 3, 1, 0)).reshape(9 * in_ch, out_ch)
                .astype(jnp.bfloat16),
        w2_k=jnp.transpose(w2, (2, 3, 1, 0)).reshape(9 * out_ch, out_ch)
                .astype(jnp.bfloat16),
        s1=s1, b1=b1, s2=s2, b2=b2,
        # raw params for the pure-JAX references
        w1_oihw=w1, cb1=cb1, g1=g1, beta1=beta1, m1=m1, v1=v1,
        w2_oihw=w2, cb2=cb2, g2=g2, beta2=beta2, m2=m2, v2=v2,
    )


def _conv_bn_relu_ref(h, w, cb, g, beta, m, v, cast_bf16):
    if cast_bf16:
        h = h.astype(jnp.bfloat16)
        w = w.astype(jnp.bfloat16)
    y = lax.conv_general_dilated(
        h, w, window_strides=(1, 1), padding=((1, 1), (1, 1)),
        dimension_numbers=("NCHW", "OIHW", "NCHW"),
        preferred_element_type=jnp.float32)
    s = g / jnp.sqrt(v + EPS)
    b = (cb - m) * s + beta
    y = y * s[None, :, None, None] + b[None, :, None, None]
    return jnp.maximum(y, 0.0)


def ref_forward(x_nchw, p, cast_bf16=False):
    """Pure-JAX reference of DownLayer (inference-mode BN).

    cast_bf16=True mimics the kernel's bf16 MXU operands (f32 accumulation)."""
    B, C, H, W = x_nchw.shape
    xp = x_nchw.astype(jnp.bfloat16) if cast_bf16 else x_nchw
    xp = xp.reshape(B, C, H // 2, 2, W // 2, 2).max(axis=(3, 5))
    h = _conv_bn_relu_ref(xp, p["w1_oihw"], p["cb1"], p["g1"], p["beta1"],
                          p["m1"], p["v1"], cast_bf16)
    h = _conv_bn_relu_ref(h, p["w2_oihw"], p["cb2"], p["g2"], p["beta2"],
                          p["m2"], p["v2"], cast_bf16)
    return h


if __name__ == "__main__":
    key = jax.random.PRNGKey(0)
    B, in_ch, out_ch, H, W = 2, 4, 8, 16, 16
    kx, kp = jax.random.split(key)
    x = jax.random.normal(kx, (B, in_ch, H, W), jnp.float32)
    params = init_params(kp, in_ch, out_ch)

    out = downlayer_forward(x, params)
    out = jax.block_until_ready(out)
    assert out.shape == (B, out_ch, H // 2, W // 2), out.shape

    # Primary check: reference with the same bf16 conv-operand precision.
    ref_bf16 = ref_forward(x, params, cast_bf16=True)
    err_bf16 = float(jnp.max(jnp.abs(out - ref_bf16)))
    assert err_bf16 < 1e-3, f"mismatch vs bf16-matched reference: {err_bf16}"

    # Sanity check: close to the exact f32 PyTorch-semantics reference.
    ref_f32 = ref_forward(x, params, cast_bf16=False)
    err_f32 = float(jnp.max(jnp.abs(out - ref_f32)))
    assert err_f32 < 5e-2, f"mismatch vs f32 reference: {err_f32}"

    print("KERNEL_OK")
</pallas_src>

<mosaic_0001>
module attributes {stable_mosaic.version = 11 : i64} {
  func.func @downlayer_kernel(%arg0: i32, %arg1: memref<1x16x8x8xbf16, #tpu.memory_space<vmem>>, %arg2: memref<36x8xbf16, #tpu.memory_space<vmem>>, %arg3: memref<1x8xf32, #tpu.memory_space<vmem>>, %arg4: memref<1x8xf32, #tpu.memory_space<vmem>>, %arg5: memref<72x8xbf16, #tpu.memory_space<vmem>>, %arg6: memref<1x8xf32, #tpu.memory_space<vmem>>, %arg7: memref<1x8xf32, #tpu.memory_space<vmem>>, %arg8: memref<1x64x8xf32, #tpu.memory_space<vmem>>, %arg9: memref<10x10x4xbf16, #tpu.memory_space<vmem>>, %arg10: memref<10x10x8xbf16, #tpu.memory_space<vmem>>) attributes {dimension_semantics = [#tpu.dimension_semantics<parallel>], iteration_bounds = array<i64: 2>, scalar_prefetch = 0 : i64, scratch_operands = 2 : i64, tpu.core_type = #tpu.core_type<tc>, window_params = [{transform_indices = @transform_0, window_bounds = array<i64: 1, 16, 8, 8>}, {pipeline_mode = #tpu.pipeline_mode<synchronous>, transform_indices = @transform_1, window_bounds = array<i64: 36, 8>}, {pipeline_mode = #tpu.pipeline_mode<synchronous>, transform_indices = @transform_2, window_bounds = array<i64: 1, 8>}, {pipeline_mode = #tpu.pipeline_mode<synchronous>, transform_indices = @transform_3, window_bounds = array<i64: 1, 8>}, {pipeline_mode = #tpu.pipeline_mode<synchronous>, transform_indices = @transform_4, window_bounds = array<i64: 72, 8>}, {pipeline_mode = #tpu.pipeline_mode<synchronous>, transform_indices = @transform_5, window_bounds = array<i64: 1, 8>}, {pipeline_mode = #tpu.pipeline_mode<synchronous>, transform_indices = @transform_6, window_bounds = array<i64: 1, 8>}, {transform_indices = @transform_7, window_bounds = array<i64: 1, 64, 8>}]} {
    %c0 = arith.constant 0 : index
    %c0_0 = arith.constant 0 : index
    %c0_1 = arith.constant 0 : index
    %c0_2 = arith.constant 0 : index
    %0 = vector.load %arg1[%c0, %c0_0, %c0_1, %c0_2] : memref<1x16x8x8xbf16, #tpu.memory_space<vmem>>, vector<1x16x8x8xbf16>
    %1 = vector.shape_cast %0 : vector<1x16x8x8xbf16> to vector<16x8x8xbf16>
    %2 = vector.extract_strided_slice %1 {offsets = [0, 0, 0], sizes = [16, 8, 4], strides = [1, 1, 1]} : vector<16x8x8xbf16> to vector<16x8x4xbf16>
    %3 = vector.extract_strided_slice %1 {offsets = [0, 0, 4], sizes = [16, 8, 4], strides = [1, 1, 1]} : vector<16x8x8xbf16> to vector<16x8x4xbf16>
    %4 = arith.maximumf %2, %3 : vector<16x8x4xbf16>
    %5 = vector.shape_cast %4 : vector<16x8x4xbf16> to vector<8x2x8x4xbf16>
    %6 = vector.extract_strided_slice %5 {offsets = [0, 0, 0, 0], sizes = [8, 1, 8, 4], strides = [1, 1, 1, 1]} : vector<8x2x8x4xbf16> to vector<8x1x8x4xbf16>
    %7 = vector.shape_cast %6 : vector<8x1x8x4xbf16> to vector<8x8x4xbf16>
    %8 = vector.extract_strided_slice %5 {offsets = [0, 1, 0, 0], sizes = [8, 1, 8, 4], strides = [1, 1, 1, 1]} : vector<8x2x8x4xbf16> to vector<8x1x8x4xbf16>
    %9 = vector.shape_cast %8 : vector<8x1x8x4xbf16> to vector<8x8x4xbf16>
    %10 = arith.maximumf %7, %9 : vector<8x8x4xbf16>
    %cst = arith.constant 0.000000e+00 : bf16
    %11 = vector.broadcast %cst : bf16 to vector<1x10x4xbf16>
    %c0_3 = arith.constant 0 : index
    %c0_4 = arith.constant 0 : index
    %c0_5 = arith.constant 0 : index
    %12 = vector.load %arg9[%c0_3, %c0_4, %c0_5] : memref<10x10x4xbf16, #tpu.memory_space<vmem>>, vector<1x10x4xbf16>
    tpu.vector_store %arg9[%c0_3, %c0_4, %c0_5], %11 {strides = array<i32>} : memref<10x10x4xbf16, #tpu.memory_space<vmem>>, vector<1x10x4xbf16>,
    %cst_6 = arith.constant 0.000000e+00 : bf16
    %13 = vector.broadcast %cst_6 : bf16 to vector<1x10x4xbf16>
    %c9 = arith.constant 9 : index
    %c0_7 = arith.constant 0 : index
    %c0_8 = arith.constant 0 : index
    %14 = vector.load %arg9[%c9, %c0_7, %c0_8] : memref<10x10x4xbf16, #tpu.memory_space<vmem>>, vector<1x10x4xbf16>
    tpu.vector_store %arg9[%c9, %c0_7, %c0_8], %13 {strides = array<i32>} : memref<10x10x4xbf16, #tpu.memory_space<vmem>>, vector<1x10x4xbf16>,
    %cst_9 = arith.constant 0.000000e+00 : bf16
    %15 = vector.broadcast %cst_9 : bf16 to vector<8x1x4xbf16>
    %c1 = arith.constant 1 : index
    %c0_10 = arith.constant 0 : index
    %c0_11 = arith.constant 0 : index
    %16 = vector.load %arg9[%c1, %c0_10, %c0_11] : memref<10x10x4xbf16, #tpu.memory_space<vmem>>, vector<8x1x4xbf16>
    tpu.vector_store %arg9[%c1, %c0_10, %c0_11], %15 {strides = array<i32>} : memref<10x10x4xbf16, #tpu.memory_space<vmem>>, vector<8x1x4xbf16>,
    %cst_12 = arith.constant 0.000000e+00 : bf16
    %17 = vector.broadcast %cst_12 : bf16 to vector<8x1x4xbf16>
    %c1_13 = arith.constant 1 : index
    %c9_14 = arith.constant 9 : index
    %c0_15 = arith.constant 0 : index
    %18 = vector.load %arg9[%c1_13, %c9_14, %c0_15] : memref<10x10x4xbf16, #tpu.memory_space<vmem>>, vector<8x1x4xbf16>
    tpu.vector_store %arg9[%c1_13, %c9_14, %c0_15], %17 {strides = array<i32>} : memref<10x10x4xbf16, #tpu.memory_space<vmem>>, vector<8x1x4xbf16>,
    %cst_16 = arith.constant 0.000000e+00 : bf16
    %19 = vector.broadcast %cst_16 : bf16 to vector<1x10x8xbf16>
    %c0_17 = arith.constant 0 : index
    %c0_18 = arith.constant 0 : index
    %c0_19 = arith.constant 0 : index
    %20 = vector.load %arg10[%c0_17, %c0_18, %c0_19] : memref<10x10x8xbf16, #tpu.memory_space<vmem>>, vector<1x10x8xbf16>
    tpu.vector_store %arg10[%c0_17, %c0_18, %c0_19], %19 {strides = array<i32>} : memref<10x10x8xbf16, #tpu.memory_space<vmem>>, vector<1x10x8xbf16>,
    %cst_20 = arith.constant 0.000000e+00 : bf16
    %21 = vector.broadcast %cst_20 : bf16 to vector<1x10x8xbf16>
    %c9_21 = arith.constant 9 : index
    %c0_22 = arith.constant 0 : index
    %c0_23 = arith.constant 0 : index
    %22 = vector.load %arg10[%c9_21, %c0_22, %c0_23] : memref<10x10x8xbf16, #tpu.memory_space<vmem>>, vector<1x10x8xbf16>
    tpu.vector_store %arg10[%c9_21, %c0_22, %c0_23], %21 {strides = array<i32>} : memref<10x10x8xbf16, #tpu.memory_space<vmem>>, vector<1x10x8xbf16>,
    %cst_24 = arith.constant 0.000000e+00 : bf16
    %23 = vector.broadcast %cst_24 : bf16 to vector<8x1x8xbf16>
    %c1_25 = arith.constant 1 : index
    %c0_26 = arith.constant 0 : index
    %c0_27 = arith.constant 0 : index
    %24 = vector.load %arg10[%c1_25, %c0_26, %c0_27] : memref<10x10x8xbf16, #tpu.memory_space<vmem>>, vector<8x1x8xbf16>
    tpu.vector_store %arg10[%c1_25, %c0_26, %c0_27], %23 {strides = array<i32>} : memref<10x10x8xbf16, #tpu.memory_space<vmem>>, vector<8x1x8xbf16>,
    %cst_28 = arith.constant 0.000000e+00 : bf16
    %25 = vector.broadcast %cst_28 : bf16 to vector<8x1x8xbf16>
    %c1_29 = arith.constant 1 : index
    %c9_30 = arith.constant 9 : index
    %c0_31 = arith.constant 0 : index
    %26 = vector.load %arg10[%c1_29, %c9_30, %c0_31] : memref<10x10x8xbf16, #tpu.memory_space<vmem>>, vector<8x1x8xbf16>
    tpu.vector_store %arg10[%c1_29, %c9_30, %c0_31], %25 {strides = array<i32>} : memref<10x10x8xbf16, #tpu.memory_space<vmem>>, vector<8x1x8xbf16>,
    %c1_32 = arith.constant 1 : index
    %c1_33 = arith.constant 1 : index
    %c0_34 = arith.constant 0 : index
    %27 = vector.load %arg9[%c1_32, %c1_33, %c0_34] : memref<10x10x4xbf16, #tpu.memory_space<vmem>>, vector<8x8x4xbf16>
    tpu.vector_store %arg9[%c1_32, %c1_33, %c0_34], %10 {strides = array<i32>} : memref<10x10x4xbf16, #tpu.memory_space<vmem>>, vector<8x8x4xbf16>,
    %c0_35 = arith.constant 0 : index
    %c0_36 = arith.constant 0 : index
    %c0_37 = arith.constant 0 : index
    %28 = vector.load %arg9[%c0_35, %c0_36, %c0_37] : memref<10x10x4xbf16, #tpu.memory_space<vmem>>, vector<8x8x4xbf16>
    %c0_38 = arith.constant 0 : index
    %c1_39 = arith.constant 1 : index
    %c0_40 = arith.constant 0 : index
    %29 = vector.load %arg9[%c0_38, %c1_39, %c0_40] : memref<10x10x4xbf16, #tpu.memory_space<vmem>>, vector<8x8x4xbf16>
    %c0_41 = arith.constant 0 : index
    %c2 = arith.constant 2 : index
    %c0_42 = arith.constant 0 : index
    %30 = vector.load %arg9[%c0_41, %c2, %c0_42] : memref<10x10x4xbf16, #tpu.memory_space<vmem>>, vector<8x8x4xbf16>
    %c1_43 = arith.constant 1 : index
    %c0_44 = arith.constant 0 : index
    %c0_45 = arith.constant 0 : index
    %31 = vector.load %arg9[%c1_43, %c0_44, %c0_45] : memref<10x10x4xbf16, #tpu.memory_space<vmem>>, vector<8x8x4xbf16>
    %c1_46 = arith.constant 1 : index
    %c1_47 = arith.constant 1 : index
    %c0_48 = arith.constant 0 : index
    %32 = vector.load %arg9[%c1_46, %c1_47, %c0_48] : memref<10x10x4xbf16, #tpu.memory_space<vmem>>, vector<8x8x4xbf16>
    %c1_49 = arith.constant 1 : index
    %c2_50 = arith.constant 2 : index
    %c0_51 = arith.constant 0 : index
    %33 = vector.load %arg9[%c1_49, %c2_50, %c0_51] : memref<10x10x4xbf16, #tpu.memory_space<vmem>>, vector<8x8x4xbf16>
    %c2_52 = arith.constant 2 : index
    %c0_53 = arith.constant 0 : index
    %c0_54 = arith.constant 0 : index
    %34 = vector.load %arg9[%c2_52, %c0_53, %c0_54] : memref<10x10x4xbf16, #tpu.memory_space<vmem>>, vector<8x8x4xbf16>
    %c2_55 = arith.constant 2 : index
    %c1_56 = arith.constant 1 : index
    %c0_57 = arith.constant 0 : index
    %35 = vector.load %arg9[%c2_55, %c1_56, %c0_57] : memref<10x10x4xbf16, #tpu.memory_space<vmem>>, vector<8x8x4xbf16>
    %c2_58 = arith.constant 2 : index
    %c2_59 = arith.constant 2 : index
    %c0_60 = arith.constant 0 : index
    %36 = vector.load %arg9[%c2_58, %c2_59, %c0_60] : memref<10x10x4xbf16, #tpu.memory_space<vmem>>, vector<8x8x4xbf16>
    %37 = tpu.concatenate %28, %29, %30, %31, %32, %33, %34, %35, %36 in 2 : vector<8x8x4xbf16>, vector<8x8x4xbf16>, vector<8x8x4xbf16>, vector<8x8x4xbf16>, vector<8x8x4xbf16>, vector<8x8x4xbf16>, vector<8x8x4xbf16>, vector<8x8x4xbf16>, vector<8x8x4xbf16> -> vector<8x8x36xbf16>
    %38 = vector.shape_cast %37 : vector<8x8x36xbf16> to vector<64x36xbf16>
    %c0_61 = arith.constant 0 : index
    %c0_62 = arith.constant 0 : index
    %39 = vector.load %arg2[%c0_61, %c0_62] : memref<36x8xbf16, #tpu.memory_space<vmem>>, vector<36x8xbf16>
    %cst_63 = arith.constant dense<0.000000e+00> : vector<64x8xf32>
    %40 = tpu.matmul %38, %39, %cst_63 {dimension_numbers = #tpu.dot_dimension_numbers<[1], [0], [0], [1], [0, 0, 1, 1], [], []>} : vector<64x36xbf16>, vector<36x8xbf16>, vector<64x8xf32> -> vector<64x8xf32>
    %c0_64 = arith.constant 0 : index
    %c0_65 = arith.constant 0 : index
    %41 = vector.load %arg3[%c0_64, %c0_65] : memref<1x8xf32, #tpu.memory_space<vmem>>, vector<1x8xf32>
    %42 = vector.broadcast %41 : vector<1x8xf32> to vector<64x8xf32>
    %43 = arith.mulf %40, %42 : vector<64x8xf32>
    %c0_66 = arith.constant 0 : index
    %c0_67 = arith.constant 0 : index
    %44 = vector.load %arg4[%c0_66, %c0_67] : memref<1x8xf32, #tpu.memory_space<vmem>>, vector<1x8xf32>
    %45 = vector.broadcast %44 : vector<1x8xf32> to vector<64x8xf32>
    %46 = arith.addf %43, %45 : vector<64x8xf32>
    %cst_68 = arith.constant 0.000000e+00 : f32
    %47 = vector.broadcast %cst_68 : f32 to vector<64x8xf32>
    %48 = arith.maximumf %46, %47 : vector<64x8xf32>
    %49 = vector.shape_cast %48 : vector<64x8xf32> to vector<8x8x8xf32>
    %50 = arith.truncf %49 : vector<8x8x8xf32> to vector<8x8x8xbf16>
    %c1_69 = arith.constant 1 : index
    %c1_70 = arith.constant 1 : index
    %c0_71 = arith.constant 0 : index
    %51 = vector.load %arg10[%c1_69, %c1_70, %c0_71] : memref<10x10x8xbf16, #tpu.memory_space<vmem>>, vector<8x8x8xbf16>
    tpu.vector_store %arg10[%c1_69, %c1_70, %c0_71], %50 {strides = array<i32>} : memref<10x10x8xbf16, #tpu.memory_space<vmem>>, vector<8x8x8xbf16>,
    %c0_72 = arith.constant 0 : index
    %c0_73 = arith.constant 0 : index
    %c0_74 = arith.constant 0 : index
    %52 = vector.load %arg10[%c0_72, %c0_73, %c0_74] : memref<10x10x8xbf16, #tpu.memory_space<vmem>>, vector<8x8x8xbf16>
    %c0_75 = arith.constant 0 : index
    %c1_76 = arith.constant 1 : index
    %c0_77 = arith.constant 0 : index
    %53 = vector.load %arg10[%c0_75, %c1_76, %c0_77] : memref<10x10x8xbf16, #tpu.memory_space<vmem>>, vector<8x8x8xbf16>
    %c0_78 = arith.constant 0 : index
    %c2_79 = arith.constant 2 : index
    %c0_80 = arith.constant 0 : index
    %54 = vector.load %arg10[%c0_78, %c2_79, %c0_80] : memref<10x10x8xbf16, #tpu.memory_space<vmem>>, vector<8x8x8xbf16>
    %c1_81 = arith.constant 1 : index
    %c0_82 = arith.constant 0 : index
    %c0_83 = arith.constant 0 : index
    %55 = vector.load %arg10[%c1_81, %c0_82, %c0_83] : memref<10x10x8xbf16, #tpu.memory_space<vmem>>, vector<8x8x8xbf16>
    %c1_84 = arith.constant 1 : index
    %c1_85 = arith.constant 1 : index
    %c0_86 = arith.constant 0 : index
    %56 = vector.load %arg10[%c1_84, %c1_85, %c0_86] : memref<10x10x8xbf16, #tpu.memory_space<vmem>>, vector<8x8x8xbf16>
    %c1_87 = arith.constant 1 : index
    %c2_88 = arith.constant 2 : index
    %c0_89 = arith.constant 0 : index
    %57 = vector.load %arg10[%c1_87, %c2_88, %c0_89] : memref<10x10x8xbf16, #tpu.memory_space<vmem>>, vector<8x8x8xbf16>
    %c2_90 = arith.constant 2 : index
    %c0_91 = arith.constant 0 : index
    %c0_92 = arith.constant 0 : index
    %58 = vector.load %arg10[%c2_90, %c0_91, %c0_92] : memref<10x10x8xbf16, #tpu.memory_space<vmem>>, vector<8x8x8xbf16>
    %c2_93 = arith.constant 2 : index
    %c1_94 = arith.constant 1 : index
    %c0_95 = arith.constant 0 : index
    %59 = vector.load %arg10[%c2_93, %c1_94, %c0_95] : memref<10x10x8xbf16, #tpu.memory_space<vmem>>, vector<8x8x8xbf16>
    %c2_96 = arith.constant 2 : index
    %c2_97 = arith.constant 2 : index
    %c0_98 = arith.constant 0 : index
    %60 = vector.load %arg10[%c2_96, %c2_97, %c0_98] : memref<10x10x8xbf16, #tpu.memory_space<vmem>>, vector<8x8x8xbf16>
    %61 = tpu.concatenate %52, %53, %54, %55, %56, %57, %58, %59, %60 in 2 : vector<8x8x8xbf16>, vector<8x8x8xbf16>, vector<8x8x8xbf16>, vector<8x8x8xbf16>, vector<8x8x8xbf16>, vector<8x8x8xbf16>, vector<8x8x8xbf16>, vector<8x8x8xbf16>, vector<8x8x8xbf16> -> vector<8x8x72xbf16>
    %62 = vector.shape_cast %61 : vector<8x8x72xbf16> to vector<64x72xbf16>
    %c0_99 = arith.constant 0 : index
    %c0_100 = arith.constant 0 : index
    %63 = vector.load %arg5[%c0_99, %c0_100] : memref<72x8xbf16, #tpu.memory_space<vmem>>, vector<72x8xbf16>
    %cst_101 = arith.constant dense<0.000000e+00> : vector<64x8xf32>
    %64 = tpu.matmul %62, %63, %cst_101 {dimension_numbers = #tpu.dot_dimension_numbers<[1], [0], [0], [1], [0, 0, 1, 1], [], []>} : vector<64x72xbf16>, vector<72x8xbf16>, vector<64x8xf32> -> vector<64x8xf32>
    %c0_102 = arith.constant 0 : index
    %c0_103 = arith.constant 0 : index
    %65 = vector.load %arg6[%c0_102, %c0_103] : memref<1x8xf32, #tpu.memory_space<vmem>>, vector<1x8xf32>
    %66 = vector.broadcast %65 : vector<1x8xf32> to vector<64x8xf32>
    %67 = arith.mulf %64, %66 : vector<64x8xf32>
    %c0_104 = arith.constant 0 : index
    %c0_105 = arith.constant 0 : index
    %68 = vector.load %arg7[%c0_104, %c0_105] : memref<1x8xf32, #tpu.memory_space<vmem>>, vector<1x8xf32>
    %69 = vector.broadcast %68 : vector<1x8xf32> to vector<64x8xf32>
    %70 = arith.addf %67, %69 : vector<64x8xf32>
    %cst_106 = arith.constant 0.000000e+00 : f32
    %71 = vector.broadcast %cst_106 : f32 to vector<64x8xf32>
    %72 = arith.maximumf %70, %71 : vector<64x8xf32>
    %c0_107 = arith.constant 0 : index
    %c0_108 = arith.constant 0 : index
    %c0_109 = arith.constant 0 : index
    %73 = vector.load %arg8[%c0_107, %c0_108, %c0_109] : memref<1x64x8xf32, #tpu.memory_space<vmem>>, vector<1x64x8xf32>
    %74 = vector.shape_cast %73 : vector<1x64x8xf32> to vector<64x8xf32>
    %75 = vector.shape_cast %72 : vector<64x8xf32> to vector<1x64x8xf32>
    tpu.vector_store %arg8[%c0_107, %c0_108, %c0_109], %75 {strides = array<i32>} : memref<1x64x8xf32, #tpu.memory_space<vmem>>, vector<1x64x8xf32>,
    return
  }
  func.func @transform_0(%arg0: i32) -> (i32, i32, i32, i32) {
    %c0_i32 = arith.constant 0 : i32
    %c0_i32_0 = arith.constant 0 : i32
    %c0_i32_1 = arith.constant 0 : i32
    %c0_i32_2 = arith.constant 0 : i32
    return %arg0, %c0_i32, %c0_i32_0, %c0_i32_1 : i32, i32, i32, i32
  }
  func.func @transform_1(%arg0: i32) -> (i32, i32) {
    %c0_i32 = arith.constant 0 : i32
    %c0_i32_0 = arith.constant 0 : i32
    %c0_i32_1 = arith.constant 0 : i32
    return %c0_i32, %c0_i32_0 : i32, i32
  }
  func.func @transform_2(%arg0: i32) -> (i32, i32) {
    %c0_i32 = arith.constant 0 : i32
    %c0_i32_0 = arith.constant 0 : i32
    %c0_i32_1 = arith.constant 0 : i32
    return %c0_i32, %c0_i32_0 : i32, i32
  }
  func.func @transform_3(%arg0: i32) -> (i32, i32) {
    %c0_i32 = arith.constant 0 : i32
    %c0_i32_0 = arith.constant 0 : i32
    %c0_i32_1 = arith.constant 0 : i32
    return %c0_i32, %c0_i32_0 : i32, i32
  }
  func.func @transform_4(%arg0: i32) -> (i32, i32) {
    %c0_i32 = arith.constant 0 : i32
    %c0_i32_0 = arith.constant 0 : i32
    %c0_i32_1 = arith.constant 0 : i32
    return %c0_i32, %c0_i32_0 : i32, i32
  }
  func.func @transform_5(%arg0: i32) -> (i32, i32) {
    %c0_i32 = arith.constant 0 : i32
    %c0_i32_0 = arith.constant 0 : i32
    %c0_i32_1 = arith.constant 0 : i32
    return %c0_i32, %c0_i32_0 : i32, i32
  }
  func.func @transform_6(%arg0: i32) -> (i32, i32) {
    %c0_i32 = arith.constant 0 : i32
    %c0_i32_0 = arith.constant 0 : i32
    %c0_i32_1 = arith.constant 0 : i32
    return %c0_i32, %c0_i32_0 : i32, i32
  }
  func.func @transform_7(%arg0: i32) -> (i32, i32, i32) {
    %c0_i32 = arith.constant 0 : i32
    %c0_i32_0 = arith.constant 0 : i32
    %c0_i32_1 = arith.constant 0 : i32
    return %arg0, %c0_i32, %c0_i32_0 : i32, i32, i32
  }
}

</mosaic_0001>

<llo_original>
// kernel: tpu_custom_call.1
$region0: #{tpu_custom_call.1}
  #allocation0 [shape = 'u32[]', space=smem, size = 0x4, offset = 0x4, fixed_abs, tag = 'smem constant byte address 0x4 - core index']
  #allocation1 [shape = 'u32[72,128]{1,0:T(1,128)}', space=vmem, size = 0x9000, scoped, tag = 'internal scratch']
  #allocation2 [shape = 'bf16[10,10,4]{2,1,0:T(8,128)(2,1)}', space=vmem, size = 0xa000, scoped, tag = 'scratch operand']
  #allocation3 [shape = 'bf16[10,10,8]{2,1,0:T(8,128)(2,1)}', space=vmem, size = 0xa000, scoped, tag = 'scratch operand']
  %s0 = inlined_call_operand.vmem [shape: bf16[2,16,8,8], index: 0, kind: input, shape index: {}]
  %s1 = inlined_call_operand.vmem [shape: bf16[36,8], index: 1, kind: input, shape index: {}]
  %s2 = inlined_call_operand.vmem [shape: f32[1,8], index: 2, kind: input, shape index: {}]
  %s3 = inlined_call_operand.vmem [shape: f32[1,8], index: 3, kind: input, shape index: {}]
  %s4 = inlined_call_operand.vmem [shape: bf16[72,8], index: 4, kind: input, shape index: {}]
  %s5 = inlined_call_operand.vmem [shape: f32[1,8], index: 5, kind: input, shape index: {}]
  %s6 = inlined_call_operand.vmem [shape: f32[1,8], index: 6, kind: input, shape index: {}]
  %s7 = inlined_call_operand.vmem [shape: f32[2,64,8], index: 7, kind: output, shape index: {}]
  %s8 = sld [smem:[#allocation0]]
  $region61: #{tpu_custom_call.1} parent=0
    _
  %s10 = ssub.s32 1, %s8
  %s11 = scalar_select 0, %s10, %s8
  loop: start=0, step=1, limit=4
  $region2: #{tpu_custom_call.1} parent=0 // loop_pre_header
    _
  $region3: #{tpu_custom_call.1} parent=0 // loop_header
    %s13 = sphi 0, %s17
    %p14 = scmp.ge.s32.totalorder %s13, 4
    %s23 = sphi 0, %s25
    %s26 = sphi 0, %s23
    %s27 = sphi 0, %s26
    %s43 = sphi 0, %s27
    %s47 = sphi 0, %s47
    %s49 = sphi 0, %s47
    %s50 = sphi 0, %s49
    %s64 = sphi 0, %s50
    %s68 = sphi 0, %s68
    %s70 = sphi 0, %s68
    %s71 = sphi 0, %s70
    %s85 = sphi 0, %s71
    %s89 = sphi 0, %s89
    %s91 = sphi 0, %s89
    %s92 = sphi 0, %s91
    %s106 = sphi 0, %s92
    %s110 = sphi 0, %s110
    %s112 = sphi 0, %s110
    %s113 = sphi 0, %s112
    %s127 = sphi 0, %s113
    %s131 = sphi 0, %s131
    %s133 = sphi 0, %s131
    %s134 = sphi 0, %s133
    %s148 = sphi 0, %s134
    %s152 = sphi 0, %s152
    %s154 = sphi 0, %s152
    %s155 = sphi 0, %s154
    %s169 = sphi 0, %s155
    %s175 = sphi 0, %s177
    %s178 = sphi 0, %s175
    %s179 = sphi 0, %s178
    %s195 = sphi 0, %s179
  $region4: #{tpu_custom_call.1} parent=0 // loop_header_branch
    %16 = sbr.rel (%p14) target = $region8
  $region5: #{tpu_custom_call.1} parent=0 // loop_body
    %s18 = ssub.s32 %s13, 1
    %s19 = ssub.s32 %s13, 2
    %s20 = sadd.s32 %s13, 1
    %s21 = ssub.s32 %s13, %s20
    %p22 = scmp.eq.s32.totalorder %s21, 0
    %s24 = sadd.s32 %s23, 1
    %s25 = scalar_select %p22, %s23, %s24
    %p28 = pneg %p22
    %p29 = scmp.eq.s32.totalorder %s13, 1
    %p30 = por %p28, %p29
    %p31 = scmp.ne.s32.totalorder %s23, %s26
    %p32 = scmp.eq.s32.totalorder %s13, 0
    %p33 = por %p31, %p32
    %p34 = scmp.ne.s32.totalorder %s23, %s26
    %p35 = scmp.eq.s32.totalorder %s18, 1
    %p36 = por %p34, %p35
    %p37 = scmp.ne.s32.totalorder %s26, %s27
    %p38 = scmp.eq.s32.totalorder %s18, 0
    %p39 = por %p37, %p38
    %p40 = scmp.ne.s32.totalorder %s26, %s27
    %p41 = scmp.eq.s32.totalorder %s19, 1
    %p42 = por %p40, %p41
    %p44 = scmp.ne.s32.totalorder %s27, %s43
    %p45 = scmp.eq.s32.totalorder %s19, 0
    %p46 = por %p44, %p45
    %s48 = sadd.s32 %s47, 1
    %p51 = scmp.eq.s32.totalorder %s13, 1
    %p52 = scmp.ne.s32.totalorder %s47, %s49
    %p53 = scmp.eq.s32.totalorder %s13, 0
    %p54 = por %p52, %p53
    %p55 = scmp.ne.s32.totalorder %s47, %s49
    %p56 = scmp.eq.s32.totalorder %s18, 1
    %p57 = por %p55, %p56
    %p58 = scmp.ne.s32.totalorder %s49, %s50
    %p59 = scmp.eq.s32.totalorder %s18, 0
    %p60 = por %p58, %p59
    %p61 = scmp.ne.s32.totalorder %s49, %s50
    %p62 = scmp.eq.s32.totalorder %s19, 1
    %p63 = por %p61, %p62
    %p65 = scmp.ne.s32.totalorder %s50, %s64
    %p66 = scmp.eq.s32.totalorder %s19, 0
    %p67 = por %p65, %p66
    %s69 = sadd.s32 %s68, 1
    %p72 = scmp.eq.s32.totalorder %s13, 1
    %p73 = scmp.ne.s32.totalorder %s68, %s70
    %p74 = scmp.eq.s32.totalorder %s13, 0
    %p75 = por %p73, %p74
    %p76 = scmp.ne.s32.totalorder %s68, %s70
    %p77 = scmp.eq.s32.totalorder %s18, 1
    %p78 = por %p76, %p77
    %p79 = scmp.ne.s32.totalorder %s70, %s71
    %p80 = scmp.eq.s32.totalorder %s18, 0
    %p81 = por %p79, %p80
    %p82 = scmp.ne.s32.totalorder %s70, %s71
    %p83 = scmp.eq.s32.totalorder %s19, 1
    %p84 = por %p82, %p83
    %p86 = scmp.ne.s32.totalorder %s71, %s85
    %p87 = scmp.eq.s32.totalorder %s19, 0
    %p88 = por %p86, %p87
    %s90 = sadd.s32 %s89, 1
    %p93 = scmp.eq.s32.totalorder %s13, 1
    %p94 = scmp.ne.s32.totalorder %s89, %s91
    %p95 = scmp.eq.s32.totalorder %s13, 0
    %p96 = por %p94, %p95
    %p97 = scmp.ne.s32.totalorder %s89, %s91
    %p98 = scmp.eq.s32.totalorder %s18, 1
    %p99 = por %p97, %p98
    %p100 = scmp.ne.s32.totalorder %s91, %s92
    %p101 = scmp.eq.s32.totalorder %s18, 0
    %p102 = por %p100, %p101
    %p103 = scmp.ne.s32.totalorder %s91, %s92
    %p104 = scmp.eq.s32.totalorder %s19, 1
    %p105 = por %p103, %p104
    %p107 = scmp.ne.s32.totalorder %s92, %s106
    %p108 = scmp.eq.s32.totalorder %s19, 0
    %p109 = por %p107, %p108
    %s111 = sadd.s32 %s110, 1
    %p114 = scmp.eq.s32.totalorder %s13, 1
    %p115 = scmp.ne.s32.totalorder %s110, %s112
    %p116 = scmp.eq.s32.totalorder %s13, 0
    %p117 = por %p115, %p116
    %p118 = scmp.ne.s32.totalorder %s110, %s112
    %p119 = scmp.eq.s32.totalorder %s18, 1
    %p120 = por %p118, %p119
    %p121 = scmp.ne.s32.totalorder %s112, %s113
    %p122 = scmp.eq.s32.totalorder %s18, 0
    %p123 = por %p121, %p122
    %p124 = scmp.ne.s32.totalorder %s112, %s113
    %p125 = scmp.eq.s32.totalorder %s19, 1
    %p126 = por %p124, %p125
    %p128 = scmp.ne.s32.totalorder %s113, %s127
    %p129 = scmp.eq.s32.totalorder %s19, 0
    %p130 = por %p128, %p129
    %s132 = sadd.s32 %s131, 1
    %p135 = scmp.eq.s32.totalorder %s13, 1
    %p136 = scmp.ne.s32.totalorder %s131, %s133
    %p137 = scmp.eq.s32.totalorder %s13, 0
    %p138 = por %p136, %p137
    %p139 = scmp.ne.s32.totalorder %s131, %s133
    %p140 = scmp.eq.s32.totalorder %s18, 1
    %p141 = por %p139, %p140
    %p142 = scmp.ne.s32.totalorder %s133, %s134
    %p143 = scmp.eq.s32.totalorder %s18, 0
    %p144 = por %p142, %p143
    %p145 = scmp.ne.s32.totalorder %s133, %s134
    %p146 = scmp.eq.s32.totalorder %s19, 1
    %p147 = por %p145, %p146
    %p149 = scmp.ne.s32.totalorder %s134, %s148
    %p150 = scmp.eq.s32.totalorder %s19, 0
    %p151 = por %p149, %p150
    %s153 = sadd.s32 %s152, 1
    %p156 = scmp.eq.s32.totalorder %s13, 1
    %p157 = scmp.ne.s32.totalorder %s152, %s154
    %p158 = scmp.eq.s32.totalorder %s13, 0
    %p159 = por %p157, %p158
    %p160 = scmp.ne.s32.totalorder %s152, %s154
    %p161 = scmp.eq.s32.totalorder %s18, 1
    %p162 = por %p160, %p161
    %p163 = scmp.ne.s32.totalorder %s154, %s155
    %p164 = scmp.eq.s32.totalorder %s18, 0
    %p165 = por %p163, %p164
    %p166 = scmp.ne.s32.totalorder %s154, %s155
    %p167 = scmp.eq.s32.totalorder %s19, 1
    %p168 = por %p166, %p167
    %p170 = scmp.ne.s32.totalorder %s155, %s169
    %p171 = scmp.eq.s32.totalorder %s19, 0
    %p172 = por %p170, %p171
    %s173 = ssub.s32 %s13, %s20
    %p174 = scmp.eq.s32.totalorder %s173, 0
    %s176 = sadd.s32 %s175, 1
    %s177 = scalar_select %p174, %s175, %s176
    %p180 = pneg %p174
    %p181 = scmp.eq.s32.totalorder %s13, 1
    %p182 = por %p180, %p181
    %p183 = scmp.ne.s32.totalorder %s175, %s178
    %p184 = scmp.eq.s32.totalorder %s13, 0
    %p185 = por %p183, %p184
    %p186 = scmp.ne.s32.totalorder %s175, %s178
    %p187 = scmp.eq.s32.totalorder %s18, 1
    %p188 = por %p186, %p187
    %p189 = scmp.ne.s32.totalorder %s178, %s179
    %p190 = scmp.eq.s32.totalorder %s18, 0
    %p191 = por %p189, %p190
    %p192 = scmp.ne.s32.totalorder %s178, %s179
    %p193 = scmp.eq.s32.totalorder %s19, 1
    %p194 = por %p192, %p193
    %p196 = scmp.ne.s32.totalorder %s179, %s195
    %p197 = scmp.eq.s32.totalorder %s19, 0
    %p198 = por %p196, %p197
    %p199 = scmp.le.s32.totalorder 1, %s13
    %p200 = scmp.lt.s32.totalorder %s13, 3
    %p201 = pnand %p199, %p200
    %p202 = pneg %p201
    // Predicated region
    $region9: #{tpu_custom_call.1} parent=5 // pred_check
      _
    $region10: #{tpu_custom_call.1} parent=5 // pred_check_branch
      %204 = sbr.rel (%p201) target = $region12
    $region11: #{tpu_custom_call.1} parent=5 // pred_region
      %s205 = ssub.s32 %s13, 1
      // Predicated region
      $region13: #{tpu_custom_call.1} parent=11 // pred_check
        %p206 = pneg %p60
      $region14: #{tpu_custom_call.1} parent=11 // pred_check_branch
        %208 = sbr.rel (%p206) target = $region16
      $region15: #{tpu_custom_call.1} parent=11 // pred_region
        _
      $region16: #{tpu_custom_call.1} parent=11 // pred_fallthru
        _
      // Predicated region
      $region17: #{tpu_custom_call.1} parent=11 // pred_check
        %p209 = pneg %p81
      $region18: #{tpu_custom_call.1} parent=11 // pred_check_branch
        %211 = sbr.rel (%p209) target = $region20
      $region19: #{tpu_custom_call.1} parent=11 // pred_region
        _
      $region20: #{tpu_custom_call.1} parent=11 // pred_fallthru
        _
      // Predicated region
      $region21: #{tpu_custom_call.1} parent=11 // pred_check
        %p212 = pneg %p102
      $region22: #{tpu_custom_call.1} parent=11 // pred_check_branch
        %214 = sbr.rel (%p212) target = $region24
      $region23: #{tpu_custom_call.1} parent=11 // pred_region
        _
      $region24: #{tpu_custom_call.1} parent=11 // pred_fallthru
        _
      // Predicated region
      $region25: #{tpu_custom_call.1} parent=11 // pred_check
        %p215 = pneg %p123
      $region26: #{tpu_custom_call.1} parent=11 // pred_check_branch
        %217 = sbr.rel (%p215) target = $region28
      $region27: #{tpu_custom_call.1} parent=11 // pred_region
        _
      $region28: #{tpu_custom_call.1} parent=11 // pred_fallthru
        _
      // Predicated region
      $region29: #{tpu_custom_call.1} parent=11 // pred_check
        %p218 = pneg %p144
      $region30: #{tpu_custom_call.1} parent=11 // pred_check_branch
        %220 = sbr.rel (%p218) target = $region32
      $region31: #{tpu_custom_call.1} parent=11 // pred_region
        _
      $region32: #{tpu_custom_call.1} parent=11 // pred_fallthru
        _
      // Predicated region
      $region33: #{tpu_custom_call.1} parent=11 // pred_check
        %p221 = pneg %p165
      $region34: #{tpu_custom_call.1} parent=11 // pred_check_branch
        %223 = sbr.rel (%p221) target = $region36
      $region35: #{tpu_custom_call.1} parent=11 // pred_region
        _
      $region36: #{tpu_custom_call.1} parent=11 // pred_fallthru
        _
    $region12: #{tpu_custom_call.1} parent=5 // pred_fallthru
      _
    %p224 = scmp.lt.s32.totalorder %s13, 2
    // Predicated region
    $region37: #{tpu_custom_call.1} parent=5 // pred_check
      %p225 = pneg %p224
    $region38: #{tpu_custom_call.1} parent=5 // pred_check_branch
      %227 = sbr.rel (%p225) target = $region40
    $region39: #{tpu_custom_call.1} parent=5 // pred_region
      // Predicated region
      $region41: #{tpu_custom_call.1} parent=39 // pred_check
        %p228 = pneg %p33
      $region42: #{tpu_custom_call.1} parent=39 // pred_check_branch
        %230 = sbr.rel (%p228) target = $region44
      $region43: #{tpu_custom_call.1} parent=39 // pred_region
        %p231 = scmp.lt.s32.totalorder %s13, 1
        %s232 = scalar_select %p231, %s13, 1
        %s233 = smul.addr %s232, 16
        %s234 = smul.addr %s233, 4
        %s235 = scalar_lea.vmem %s0, %s234
      $region44: #{tpu_custom_call.1} parent=39 // pred_fallthru
        _
    $region40: #{tpu_custom_call.1} parent=5 // pred_fallthru
      _
    %p236 = scmp.le.s32.totalorder 1, %s13
    %p237 = scmp.lt.s32.totalorder %s13, 3
    %p238 = pnand %p236, %p237
    %p239 = pneg %p238
    // Predicated region
    $region45: #{tpu_custom_call.1} parent=5 // pred_check
      _
    $region46: #{tpu_custom_call.1} parent=5 // pred_check_branch
      %241 = sbr.rel (%p238) target = $region48
    $region47: #{tpu_custom_call.1} parent=5 // pred_region
      %s242 = ssub.s32 %s13, 1
      %p243 = scmp.lt.s32.totalorder %s18, 1
      %s244 = scalar_select %p243, %s18, 1
      %s245 = smul.addr %s244, 16
      %s246 = smul.addr %s245, 4
      %s247 = scalar_lea.vmem %s0, %s246
      %p248 = pneg %p39
      %p249 = pneg %p36
      %p250 = pneg %p60
      %p251 = pneg %p57
      %p252 = pneg %p81
      %p253 = pneg %p78
      %p254 = pneg %p102
      %p255 = pneg %p99
      %p256 = pneg %p123
      %p257 = pneg %p120
      %p258 = pneg %p144
      %p259 = pneg %p141
      %p260 = pneg %p165
      %p261 = pneg %p162
      %p262 = pneg %p191
      %p263 = pneg %p188
      %p264 = scmp.lt.s32.totalorder %s18, 1
      %s265 = scalar_select %p264, %s18, 1
      %s266 = smul.addr %s265, 8
      %s267 = smul.addr %s266, 8
      %s268 = scalar_lea.vmem %s7, %s267
      %p269 = scmp.lt.s32.totalorder %s18, 1
      %s270 = scalar_select %p269, %s18, 1
      %s271 = smul.addr %s270, 16
      %s272 = smul.addr %s271, 4
      %s273 = scalar_lea.vmem %s0, %s272
      %p274 = scmp.lt.s32.totalorder %s18, 1
      %s275 = scalar_select %p274, %s18, 1
      %s276 = smul.addr %s275, 8
      %s277 = smul.addr %s276, 8
      %s278 = scalar_lea.vmem %s7, %s277
      %v280 = vld [vmem:[%s273] sm:$0xf]
      %v281 = vld [vmem:[%s273 + $0x4] sm:$0xf]
      %v282 = vld [vmem:[%s273 + $0x8] sm:$0xf]
      %v283 = vld [vmem:[%s273 + $0xc] sm:$0xf]
      %v284 = vld [vmem:[%s273 + $0x10] sm:$0xf]
      %v285 = vld [vmem:[%s273 + $0x14] sm:$0xf]
      %v286 = vld [vmem:[%s273 + $0x18] sm:$0xf]
      %v287 = vld [vmem:[%s273 + $0x1c] sm:$0xf]
      %v288 = vld [vmem:[%s273 + $0x20] sm:$0xf]
      %v289 = vld [vmem:[%s273 + $0x24] sm:$0xf]
      %v290 = vld [vmem:[%s273 + $0x28] sm:$0xf]
      %v291 = vld [vmem:[%s273 + $0x2c] sm:$0xf]
      %v292 = vld [vmem:[%s273 + $0x30] sm:$0xf]
      %v293 = vld [vmem:[%s273 + $0x34] sm:$0xf]
      %v294 = vld [vmem:[%s273 + $0x38] sm:$0xf]
      %v295 = vld [vmem:[%s273 + $0x3c] sm:$0xf]
      %v296 = vunpack.c.l.bf16 %v280
      %v297 = vunpack.c.l.bf16 %v281
      %v298 = vunpack.c.l.bf16 %v282
      %v299 = vunpack.c.l.bf16 %v283
      %v300 = vunpack.c.l.bf16 %v284
      %v301 = vunpack.c.l.bf16 %v285
      %v302 = vunpack.c.l.bf16 %v286
      %v303 = vunpack.c.l.bf16 %v287
      %v304 = vunpack.c.l.bf16 %v288
      %v305 = vunpack.c.l.bf16 %v289
      %v306 = vunpack.c.l.bf16 %v290
      %v307 = vunpack.c.l.bf16 %v291
      %v308 = vunpack.c.l.bf16 %v292
      %v309 = vunpack.c.l.bf16 %v293
      %v310 = vunpack.c.l.bf16 %v294
      %v311 = vunpack.c.l.bf16 %v295
      %328 = vrot.lane.b32.xlu0 %v296, 124
      %v329 = vpop.permute.xlu0 %328
      %330 = vrot.lane.b32.xlu0 %v297, 124
      %v331 = vpop.permute.xlu0 %330
      %332 = vrot.lane.b32.xlu0 %v298, 124
      %v333 = vpop.permute.xlu0 %332
      %334 = vrot.lane.b32.xlu0 %v299, 124
      %v335 = vpop.permute.xlu0 %334
      %336 = vrot.lane.b32.xlu0 %v300, 124
      %v337 = vpop.permute.xlu0 %336
      %338 = vrot.lane.b32.xlu0 %v301, 124
      %v339 = vpop.permute.xlu0 %338
      %340 = vrot.lane.b32.xlu0 %v302, 124
      %v341 = vpop.permute.xlu0 %340
      %342 = vrot.lane.b32.xlu0 %v303, 124
      %v343 = vpop.permute.xlu0 %342
      %344 = vrot.lane.b32.xlu0 %v304, 124
      %v345 = vpop.permute.xlu0 %344
      %346 = vrot.lane.b32.xlu0 %v305, 124
      %v347 = vpop.permute.xlu0 %346
      %348 = vrot.lane.b32.xlu0 %v306, 124
      %v349 = vpop.permute.xlu0 %348
      %350 = vrot.lane.b32.xlu0 %v307, 124
      %v351 = vpop.permute.xlu0 %350
      %352 = vrot.lane.b32.xlu0 %v308, 124
      %v353 = vpop.permute.xlu0 %352
      %354 = vrot.lane.b32.xlu0 %v309, 124
      %v355 = vpop.permute.xlu0 %354
      %356 = vrot.lane.b32.xlu0 %v310, 124
      %v357 = vpop.permute.xlu0 %356
      %358 = vrot.lane.b32.xlu0 %v311, 124
      %v359 = vpop.permute.xlu0 %358
      %v376 = vmax.f32 %v296, %v329
      %v377 = vmax.f32 %v297, %v331
      %v378 = vmax.f32 %v298, %v333
      %v379 = vmax.f32 %v299, %v335
      %v380 = vmax.f32 %v300, %v337
      %v381 = vmax.f32 %v301, %v339
      %v382 = vmax.f32 %v302, %v341
      %v383 = vmax.f32 %v303, %v343
      %v384 = vmax.f32 %v304, %v345
      %v385 = vmax.f32 %v305, %v347
      %v386 = vmax.f32 %v306, %v349
      %v387 = vmax.f32 %v307, %v351
      %v388 = vmax.f32 %v308, %v353
      %v389 = vmax.f32 %v309, %v355
      %v390 = vmax.f32 %v310, %v357
      %v391 = vmax.f32 %v311, %v359
      %v392 = vpack.c.bf16 %v376, %v376
      %v393 = vpack.c.bf16 %v377, %v377
      %v394 = vpack.c.bf16 %v378, %v378
      %v395 = vpack.c.bf16 %v379, %v379
      %v396 = vpack.c.bf16 %v380, %v380
      %v397 = vpack.c.bf16 %v381, %v381
      %v398 = vpack.c.bf16 %v382, %v382
      %v399 = vpack.c.bf16 %v383, %v383
      %v400 = vpack.c.bf16 %v384, %v384
      %v401 = vpack.c.bf16 %v385, %v385
      %v402 = vpack.c.bf16 %v386, %v386
      %v403 = vpack.c.bf16 %v387, %v387
      %v404 = vpack.c.bf16 %v388, %v388
      %v405 = vpack.c.bf16 %v389, %v389
      %v406 = vpack.c.bf16 %v390, %v390
      %v407 = vpack.c.bf16 %v391, %v391
      %v408 = vunpack.c.l.bf16 %v392
      %v409 = vunpack.c.l.bf16 %v394
      %v410 = vunpack.c.l.bf16 %v396
      %v411 = vunpack.c.l.bf16 %v398
      %v412 = vunpack.c.l.bf16 %v400
      %v413 = vunpack.c.l.bf16 %v402
      %v414 = vunpack.c.l.bf16 %v404
      %v415 = vunpack.c.l.bf16 %v406
      %v416 = vunpack.c.l.bf16 %v393
      %v417 = vunpack.c.l.bf16 %v395
      %v418 = vunpack.c.l.bf16 %v397
      %v419 = vunpack.c.l.bf16 %v399
      %v420 = vunpack.c.l.bf16 %v401
      %v421 = vunpack.c.l.bf16 %v403
      %v422 = vunpack.c.l.bf16 %v405
      %v423 = vunpack.c.l.bf16 %v407
      %v424 = vmax.f32 %v408, %v416
      %v425 = vmax.f32 %v409, %v417
      %v426 = vmax.f32 %v410, %v418
      %v427 = vmax.f32 %v411, %v419
      %v428 = vmax.f32 %v412, %v420
      %v429 = vmax.f32 %v413, %v421
      %v430 = vmax.f32 %v414, %v422
      %v431 = vmax.f32 %v415, %v423
      %v432 = vpack.c.bf16 %v424, %v424
      %v433 = vpack.c.bf16 %v425, %v425
      %v434 = vpack.c.bf16 %v426, %v426
      %v435 = vpack.c.bf16 %v427, %v427
      %v436 = vpack.c.bf16 %v428, %v428
      %v437 = vpack.c.bf16 %v429, %v429
      %v438 = vpack.c.bf16 %v430, %v430
      %v439 = vpack.c.bf16 %v431, %v431
      %vm440 = vcmask 27648
      %441 = vst.msk [vmem:[#allocation2] sm:$0xf] %vm440, 0
      %vm442 = vcmask 24576
      %443 = vst.msk [vmem:[#allocation2 + $0x4] sm:$0x1] %vm442, 0
      %s444 = scalar_lea.vmem [#allocation2], 72
      %445 = vst.msk [vmem:[%s444] sm:$0xf] %vm440, 0
      %446 = vst.msk [vmem:[%s444 + $0x4] sm:$0x1] %vm442, 0
      %s447 = scalar_lea.vmem [#allocation2], 8
      %vm448 = vcmask 24576
      %vm449 = vsmask.f32 256
      %vm450 = vmand %vm448, %vm449
      %v451 = vld [vmem:[%s447] sm:$0x1]
      %v452 = vsel %vm450, 0, %v451
      %453 = vst [vmem:[%s447] sm:$0x1] %v452
      %v454 = vld [vmem:[%s447 + $0x8] sm:$0x1]
      %v455 = vsel %vm450, 0, %v454
      %456 = vst [vmem:[%s447 + $0x8] sm:$0x1] %v455
      %v457 = vld [vmem:[%s447 + $0x10] sm:$0x1]
      %v458 = vsel %vm450, 0, %v457
      %459 = vst [vmem:[%s447 + $0x10] sm:$0x1] %v458
      %v460 = vld [vmem:[%s447 + $0x18] sm:$0x1]
      %v461 = vsel %vm450, 0, %v460
      %462 = vst [vmem:[%s447 + $0x18] sm:$0x1] %v461
      %v463 = vld [vmem:[%s447 + $0x20] sm:$0x1]
      %v464 = vsel %vm450, 0, %v463
      %465 = vst [vmem:[%s447 + $0x20] sm:$0x1] %v464
      %v466 = vld [vmem:[%s447 + $0x28] sm:$0x1]
      %v467 = vsel %vm450, 0, %v466
      %468 = vst [vmem:[%s447 + $0x28] sm:$0x1] %v467
      %v469 = vld [vmem:[%s447 + $0x30] sm:$0x1]
      %v470 = vsel %vm450, 0, %v469
      %471 = vst [vmem:[%s447 + $0x30] sm:$0x1] %v470
      %v472 = vld [vmem:[%s447 + $0x38] sm:$0x1]
      %v473 = vsel %vm450, 0, %v472
      %474 = vst [vmem:[%s447 + $0x38] sm:$0x1] %v473
      %vm475 = vsmask.f32 7938
      %vm476 = vmand %vm448, %vm475
      %v477 = vld [vmem:[%s447 + $0x4] sm:$0x1]
      %v478 = vsel %vm476, 0, %v477
      %479 = vst [vmem:[%s447 + $0x4] sm:$0x1] %v478
      %v480 = vld [vmem:[%s447 + $0xc] sm:$0x1]
      %v481 = vsel %vm476, 0, %v480
      %482 = vst [vmem:[%s447 + $0xc] sm:$0x1] %v481
      %v483 = vld [vmem:[%s447 + $0x14] sm:$0x1]
      %v484 = vsel %vm476, 0, %v483
      %485 = vst [vmem:[%s447 + $0x14] sm:$0x1] %v484
      %v486 = vld [vmem:[%s447 + $0x1c] sm:$0x1]
      %v487 = vsel %vm476, 0, %v486
      %488 = vst [vmem:[%s447 + $0x1c] sm:$0x1] %v487
      %v489 = vld [vmem:[%s447 + $0x24] sm:$0x1]
      %v490 = vsel %vm476, 0, %v489
      %491 = vst [vmem:[%s447 + $0x24] sm:$0x1] %v490
      %v492 = vld [vmem:[%s447 + $0x2c] sm:$0x1]
      %v493 = vsel %vm476, 0, %v492
      %494 = vst [vmem:[%s447 + $0x2c] sm:$0x1] %v493
      %v495 = vld [vmem:[%s447 + $0x34] sm:$0x1]
      %v496 = vsel %vm476, 0, %v495
      %497 = vst [vmem:[%s447 + $0x34] sm:$0x1] %v496
      %v498 = vld [vmem:[%s447 + $0x3c] sm:$0x1]
      %v499 = vsel %vm476, 0, %v498
      %500 = vst [vmem:[%s447 + $0x3c] sm:$0x1] %v499
      %vm501 = vcmask 60416
      %502 = vst.msk [vmem:[#allocation3] sm:$0xf] %vm501, 0
      %vm503 = vcmask 57344
      %504 = vst.msk [vmem:[#allocation3 + $0x4] sm:$0x1] %vm503, 0
      %s505 = scalar_lea.vmem [#allocation3], 72
      %506 = vst.msk [vmem:[%s505] sm:$0xf] %vm501, 0
      %507 = vst.msk [vmem:[%s505 + $0x4] sm:$0x1] %vm503, 0
      %s508 = scalar_lea.vmem [#allocation3], 8
      %vm509 = vcmask 57344
      %vm510 = vmand %vm509, %vm449
      %v511 = vld [vmem:[%s508] sm:$0x1]
      %v512 = vsel %vm510, 0, %v511
      %513 = vst [vmem:[%s508] sm:$0x1] %v512
      %v514 = vld [vmem:[%s508 + $0x8] sm:$0x1]
      %v515 = vsel %vm510, 0, %v514
      %516 = vst [vmem:[%s508 + $0x8] sm:$0x1] %v515
      %v517 = vld [vmem:[%s508 + $0x10] sm:$0x1]
      %v518 = vsel %vm510, 0, %v517
      %519 = vst [vmem:[%s508 + $0x10] sm:$0x1] %v518
      %v520 = vld [vmem:[%s508 + $0x18] sm:$0x1]
      %v521 = vsel %vm510, 0, %v520
      %522 = vst [vmem:[%s508 + $0x18] sm:$0x1] %v521
      %v523 = vld [vmem:[%s508 + $0x20] sm:$0x1]
      %v524 = vsel %vm510, 0, %v523
      %525 = vst [vmem:[%s508 + $0x20] sm:$0x1] %v524
      %v526 = vld [vmem:[%s508 + $0x28] sm:$0x1]
      %v527 = vsel %vm510, 0, %v526
      %528 = vst [vmem:[%s508 + $0x28] sm:$0x1] %v527
      %v529 = vld [vmem:[%s508 + $0x30] sm:$0x1]
      %v530 = vsel %vm510, 0, %v529
      %531 = vst [vmem:[%s508 + $0x30] sm:$0x1] %v530
      %v532 = vld [vmem:[%s508 + $0x38] sm:$0x1]
      %v533 = vsel %vm510, 0, %v532
      %534 = vst [vmem:[%s508 + $0x38] sm:$0x1] %v533
      %vm535 = vmand %vm509, %vm475
      %v536 = vld [vmem:[%s508 + $0x4] sm:$0x1]
      %v537 = vsel %vm535, 0, %v536
      %538 = vst [vmem:[%s508 + $0x4] sm:$0x1] %v537
      %v539 = vld [vmem:[%s508 + $0xc] sm:$0x1]
      %v540 = vsel %vm535, 0, %v539
      %541 = vst [vmem:[%s508 + $0xc] sm:$0x1] %v540
      %v542 = vld [vmem:[%s508 + $0x14] sm:$0x1]
      %v543 = vsel %vm535, 0, %v542
      %544 = vst [vmem:[%s508 + $0x14] sm:$0x1] %v543
      %v545 = vld [vmem:[%s508 + $0x1c] sm:$0x1]
      %v546 = vsel %vm535, 0, %v545
      %547 = vst [vmem:[%s508 + $0x1c] sm:$0x1] %v546
      %v548 = vld [vmem:[%s508 + $0x24] sm:$0x1]
      %v549 = vsel %vm535, 0, %v548
      %550 = vst [vmem:[%s508 + $0x24] sm:$0x1] %v549
      %v551 = vld [vmem:[%s508 + $0x2c] sm:$0x1]
      %v552 = vsel %vm535, 0, %v551
      %553 = vst [vmem:[%s508 + $0x2c] sm:$0x1] %v552
      %v554 = vld [vmem:[%s508 + $0x34] sm:$0x1]
      %v555 = vsel %vm535, 0, %v554
      %556 = vst [vmem:[%s508 + $0x34] sm:$0x1] %v555
      %v557 = vld [vmem:[%s508 + $0x3c] sm:$0x1]
      %v558 = vsel %vm535, 0, %v557
      %559 = vst [vmem:[%s508 + $0x3c] sm:$0x1] %v558
      %v561 = vshrl.u32 %v432, 16
      %v563 = vrot.slane %v561, 7
      %v564 = vshll.u32 %v432, 16
      %v566 = vor.u32 %v563, %v564
      %v567 = vrot.slane %v563, 4
      %v569 = vshrl.u32 %v433, 16
      %v571 = vrot.slane %v569, 7
      %v572 = vshll.u32 %v433, 16
      %v574 = vor.u32 %v571, %v572
      %v575 = vrot.slane %v571, 4
      %v577 = vshrl.u32 %v434, 16
      %v579 = vrot.slane %v577, 7
      %v580 = vshll.u32 %v434, 16
      %v582 = vor.u32 %v579, %v580
      %v583 = vrot.slane %v579, 4
      %v585 = vshrl.u32 %v435, 16
      %v587 = vrot.slane %v585, 7
      %v588 = vshll.u32 %v435, 16
      %v590 = vor.u32 %v587, %v588
      %v591 = vrot.slane %v587, 4
      %v593 = vshrl.u32 %v436, 16
      %v595 = vrot.slane %v593, 7
      %v596 = vshll.u32 %v436, 16
      %v598 = vor.u32 %v595, %v596
      %v599 = vrot.slane %v595, 4
      %v601 = vshrl.u32 %v437, 16
      %v603 = vrot.slane %v601, 7
      %v604 = vshll.u32 %v437, 16
      %v606 = vor.u32 %v603, %v604
      %v607 = vrot.slane %v603, 4
      %v609 = vshrl.u32 %v438, 16
      %v611 = vrot.slane %v609, 7
      %v612 = vshll.u32 %v438, 16
      %v614 = vor.u32 %v611, %v612
      %v615 = vrot.slane %v611, 4
      %v617 = vshrl.u32 %v439, 16
      %v619 = vrot.slane %v617, 7
      %v620 = vshll.u32 %v439, 16
      %v622 = vor.u32 %v619, %v620
      %v623 = vrot.slane %v619, 4
      %vm640 = vcmask 27648
      %vm641 = vmand %vm640, %vm475
      %v642 = vld [vmem:[%s447] sm:$0xf]
      %v643 = vsel %vm641, %v566, %v642
      %644 = vst [vmem:[%s447] sm:$0xf] %v643
      %v645 = vld [vmem:[%s447 + $0x4] sm:$0x1]
      %v646 = vsel %vm450, %v567, %v645
      %647 = vst [vmem:[%s447 + $0x4] sm:$0x1] %v646
      %v648 = vld [vmem:[%s447 + $0x8] sm:$0xf]
      %v649 = vsel %vm641, %v574, %v648
      %650 = vst [vmem:[%s447 + $0x8] sm:$0xf] %v649
      %v651 = vld [vmem:[%s447 + $0xc] sm:$0x1]
      %v652 = vsel %vm450, %v575, %v651
      %653 = vst [vmem:[%s447 + $0xc] sm:$0x1] %v652
      %v654 = vld [vmem:[%s447 + $0x10] sm:$0xf]
      %v655 = vsel %vm641, %v582, %v654
      %656 = vst [vmem:[%s447 + $0x10] sm:$0xf] %v655
      %v657 = vld [vmem:[%s447 + $0x14] sm:$0x1]
      %v658 = vsel %vm450, %v583, %v657
      %659 = vst [vmem:[%s447 + $0x14] sm:$0x1] %v658
      %v660 = vld [vmem:[%s447 + $0x18] sm:$0xf]
      %v661 = vsel %vm641, %v590, %v660
      %662 = vst [vmem:[%s447 + $0x18] sm:$0xf] %v661
      %v663 = vld [vmem:[%s447 + $0x1c] sm:$0x1]
      %v664 = vsel %vm450, %v591, %v663
      %665 = vst [vmem:[%s447 + $0x1c] sm:$0x1] %v664
      %v666 = vld [vmem:[%s447 + $0x20] sm:$0xf]
      %v667 = vsel %vm641, %v598, %v666
      %668 = vst [vmem:[%s447 + $0x20] sm:$0xf] %v667
      %v669 = vld [vmem:[%s447 + $0x24] sm:$0x1]
      %v670 = vsel %vm450, %v599, %v669
      %671 = vst [vmem:[%s447 + $0x24] sm:$0x1] %v670
      %v672 = vld [vmem:[%s447 + $0x28] sm:$0xf]
      %v673 = vsel %vm641, %v606, %v672
      %674 = vst [vmem:[%s447 + $0x28] sm:$0xf] %v673
      %v675 = vld [vmem:[%s447 + $0x2c] sm:$0x1]
      %v676 = vsel %vm450, %v607, %v675
      %677 = vst [vmem:[%s447 + $0x2c] sm:$0x1] %v676
      %v678 = vld [vmem:[%s447 + $0x30] sm:$0xf]
      %v679 = vsel %vm641, %v614, %v678
      %680 = vst [vmem:[%s447 + $0x30] sm:$0xf] %v679
      %v681 = vld [vmem:[%s447 + $0x34] sm:$0x1]
      %v682 = vsel %vm450, %v615, %v681
      %683 = vst [vmem:[%s447 + $0x34] sm:$0x1] %v682
      %v684 = vld [vmem:[%s447 + $0x38] sm:$0xf]
      %v685 = vsel %vm641, %v622, %v684
      %686 = vst [vmem:[%s447 + $0x38] sm:$0xf] %v685
      %v687 = vld [vmem:[%s447 + $0x3c] sm:$0x1]
      %v688 = vsel %vm450, %v623, %v687
      %689 = vst [vmem:[%s447 + $0x3c] sm:$0x1] %v688
      %v690 = vld [vmem:[#allocation2] sm:$0xf]
      %v691 = vld [vmem:[#allocation2 + $0x8] sm:$0xf]
      %v692 = vld [vmem:[#allocation2 + $0x10] sm:$0xf]
      %v693 = vld [vmem:[#allocation2 + $0x18] sm:$0xf]
      %v694 = vld [vmem:[#allocation2 + $0x20] sm:$0xf]
      %v695 = vld [vmem:[#allocation2 + $0x28] sm:$0xf]
      %v696 = vld [vmem:[#allocation2 + $0x30] sm:$0xf]
      %v697 = vld [vmem:[#allocation2 + $0x38] sm:$0xf]
      %v698 = vld [vmem:[#allocation2 + $0x4] sm:$0x1]
      %v699 = vld [vmem:[#allocation2 + $0xc] sm:$0x1]
      %v700 = vld [vmem:[#allocation2 + $0x14] sm:$0x1]
      %v701 = vld [vmem:[#allocation2 + $0x1c] sm:$0x1]
      %v702 = vld [vmem:[#allocation2 + $0x24] sm:$0x1]
      %v703 = vld [vmem:[#allocation2 + $0x2c] sm:$0x1]
      %v704 = vld [vmem:[#allocation2 + $0x34] sm:$0x1]
      %v705 = vld [vmem:[#allocation2 + $0x3c] sm:$0x1]
      %v706 = vld [vmem:[#allocation2] sm:$0xe]
      %v707 = vld [vmem:[#allocation2 + $0x8] sm:$0xe]
      %v708 = vld [vmem:[#allocation2 + $0x10] sm:$0xe]
      %v709 = vld [vmem:[#allocation2 + $0x18] sm:$0xe]
      %v710 = vld [vmem:[#allocation2 + $0x20] sm:$0xe]
      %v711 = vld [vmem:[#allocation2 + $0x28] sm:$0xe]
      %v712 = vld [vmem:[#allocation2 + $0x30] sm:$0xe]
      %v713 = vld [vmem:[#allocation2 + $0x38] sm:$0xe]
      %v714 = vld [vmem:[%s447] sm:$0xf]
      %v715 = vld [vmem:[%s447 + $0x8] sm:$0xf]
      %v716 = vld [vmem:[%s447 + $0x10] sm:$0xf]
      %v717 = vld [vmem:[%s447 + $0x18] sm:$0xf]
      %v718 = vld [vmem:[%s447 + $0x20] sm:$0xf]
      %v719 = vld [vmem:[%s447 + $0x28] sm:$0xf]
      %v720 = vld [vmem:[%s447 + $0x30] sm:$0xf]
      %v721 = vld [vmem:[%s447 + $0x38] sm:$0xf]
      %v722 = vld [vmem:[%s447 + $0x4] sm:$0x1]
      %v723 = vld [vmem:[%s447 + $0xc] sm:$0x1]
      %v724 = vld [vmem:[%s447 + $0x14] sm:$0x1]
      %v725 = vld [vmem:[%s447 + $0x1c] sm:$0x1]
      %v726 = vld [vmem:[%s447 + $0x24] sm:$0x1]
      %v727 = vld [vmem:[%s447 + $0x2c] sm:$0x1]
      %v728 = vld [vmem:[%s447 + $0x34] sm:$0x1]
      %v729 = vld [vmem:[%s447 + $0x3c] sm:$0x1]
      %v730 = vld [vmem:[%s447] sm:$0xe]
      %v731 = vld [vmem:[%s447 + $0x8] sm:$0xe]
      %v732 = vld [vmem:[%s447 + $0x10] sm:$0xe]
      %v733 = vld [vmem:[%s447 + $0x18] sm:$0xe]
      %v734 = vld [vmem:[%s447 + $0x20] sm:$0xe]
      %v735 = vld [vmem:[%s447 + $0x28] sm:$0xe]
      %v736 = vld [vmem:[%s447 + $0x30] sm:$0xe]
      %v737 = vld [vmem:[%s447 + $0x38] sm:$0xe]
      %s738 = scalar_lea.vmem [#allocation2], 16
      %v739 = vld [vmem:[%s738] sm:$0xf]
      %v740 = vld [vmem:[%s738 + $0x8] sm:$0xf]
      %v741 = vld [vmem:[%s738 + $0x10] sm:$0xf]
      %v742 = vld [vmem:[%s738 + $0x18] sm:$0xf]
      %v743 = vld [vmem:[%s738 + $0x20] sm:$0xf]
      %v744 = vld [vmem:[%s738 + $0x28] sm:$0xf]
      %v745 = vld [vmem:[%s738 + $0x30] sm:$0xf]
      %v746 = vld [vmem:[%s738 + $0x38] sm:$0xf]
      %v747 = vld [vmem:[%s738 + $0x4] sm:$0x1]
      %v748 = vld [vmem:[%s738 + $0xc] sm:$0x1]
      %v749 = vld [vmem:[%s738 + $0x14] sm:$0x1]
      %v750 = vld [vmem:[%s738 + $0x1c] sm:$0x1]
      %v751 = vld [vmem:[%s738 + $0x24] sm:$0x1]
      %v752 = vld [vmem:[%s738 + $0x2c] sm:$0x1]
      %v753 = vld [vmem:[%s738 + $0x34] sm:$0x1]
      %v754 = vld [vmem:[%s738 + $0x3c] sm:$0x1]
      %v755 = vld [vmem:[%s738] sm:$0xe]
      %v756 = vld [vmem:[%s738 + $0x8] sm:$0xe]
      %v757 = vld [vmem:[%s738 + $0x10] sm:$0xe]
      %v758 = vld [vmem:[%s738 + $0x18] sm:$0xe]
      %v759 = vld [vmem:[%s738 + $0x20] sm:$0xe]
      %v760 = vld [vmem:[%s738 + $0x28] sm:$0xe]
      %v761 = vld [vmem:[%s738 + $0x30] sm:$0xe]
      %v762 = vld [vmem:[%s738 + $0x38] sm:$0xe]
      %v779 = vunpack.c.l.b16 %v690
      %v780 = vunpack.c.l.b16 %v698
      %v781 = vunpack.c.l.b16 %v691
      %v782 = vunpack.c.l.b16 %v699
      %v783 = vunpack.c.l.b16 %v692
      %v784 = vunpack.c.l.b16 %v700
      %v785 = vunpack.c.l.b16 %v693
      %v786 = vunpack.c.l.b16 %v701
      %v787 = vunpack.c.l.b16 %v694
      %v788 = vunpack.c.l.b16 %v702
      %v789 = vunpack.c.l.b16 %v695
      %v790 = vunpack.c.l.b16 %v703
      %v791 = vunpack.c.l.b16 %v696
      %v792 = vunpack.c.l.b16 %v704
      %v793 = vunpack.c.l.b16 %v697
      %v794 = vunpack.c.l.b16 %v705
      %v795 = vpack.c.b16 %v780, %v779
      %v796 = vpack.c.b16 %v782, %v781
      %v797 = vpack.c.b16 %v784, %v783
      %v798 = vpack.c.b16 %v786, %v785
      %v799 = vpack.c.b16 %v788, %v787
      %v800 = vpack.c.b16 %v790, %v789
      %v801 = vpack.c.b16 %v792, %v791
      %v802 = vpack.c.b16 %v794, %v793
      %v804 = vshrl.u32 %v795, 16
      %v806 = vshll.u32 %v795, 16
      %v808 = vrot.slane %v806, 1
      %v809 = vor.u32 %v804, %v808
      %v811 = vshrl.u32 %v796, 16
      %v813 = vshll.u32 %v796, 16
      %v815 = vrot.slane %v813, 1
      %v816 = vor.u32 %v811, %v815
      %v818 = vshrl.u32 %v797, 16
      %v820 = vshll.u32 %v797, 16
      %v822 = vrot.slane %v820, 1
      %v823 = vor.u32 %v818, %v822
      %v825 = vshrl.u32 %v798, 16
      %v827 = vshll.u32 %v798, 16
      %v829 = vrot.slane %v827, 1
      %v830 = vor.u32 %v825, %v829
      %v832 = vshrl.u32 %v799, 16
      %v834 = vshll.u32 %v799, 16
      %v836 = vrot.slane %v834, 1
      %v837 = vor.u32 %v832, %v836
      %v839 = vshrl.u32 %v800, 16
      %v841 = vshll.u32 %v800, 16
      %v843 = vrot.slane %v841, 1
      %v844 = vor.u32 %v839, %v843
      %v846 = vshrl.u32 %v801, 16
      %v848 = vshll.u32 %v801, 16
      %v850 = vrot.slane %v848, 1
      %v851 = vor.u32 %v846, %v850
      %v853 = vshrl.u32 %v802, 16
      %v855 = vshll.u32 %v802, 16
      %v857 = vrot.slane %v855, 1
      %v858 = vor.u32 %v853, %v857
      %859 = vrot.lane.b32.xlu0 %v809, 4
      %v860 = vpop.permute.xlu0 %859
      %861 = vrot.lane.b32.xlu0 %v816, 4
      %v862 = vpop.permute.xlu0 %861
      %863 = vrot.lane.b32.xlu0 %v823, 4
      %v864 = vpop.permute.xlu0 %863
      %865 = vrot.lane.b32.xlu0 %v830, 4
      %v866 = vpop.permute.xlu0 %865
      %867 = vrot.lane.b32.xlu0 %v837, 4
      %v868 = vpop.permute.xlu0 %867
      %869 = vrot.lane.b32.xlu0 %v844, 4
      %v870 = vpop.permute.xlu0 %869
      %871 = vrot.lane.b32.xlu0 %v851, 4
      %v872 = vpop.permute.xlu0 %871
      %873 = vrot.lane.b32.xlu0 %v858, 4
      %v874 = vpop.permute.xlu0 %873
      %v883 = vunpack.c.l.b16 %v706
      %v884 = vunpack.c.l.b16 %v707
      %v885 = vunpack.c.l.b16 %v708
      %v886 = vunpack.c.l.b16 %v709
      %v887 = vunpack.c.l.b16 %v710
      %v888 = vunpack.c.l.b16 %v711
      %v889 = vunpack.c.l.b16 %v712
      %v890 = vunpack.c.l.b16 %v713
      %v891 = vpack.c.b16 %v780, %v883
      %v892 = vpack.c.b16 %v782, %v884
      %v893 = vpack.c.b16 %v784, %v885
      %v894 = vpack.c.b16 %v786, %v886
      %v895 = vpack.c.b16 %v788, %v887
      %v896 = vpack.c.b16 %v790, %v888
      %v897 = vpack.c.b16 %v792, %v889
      %v898 = vpack.c.b16 %v794, %v890
      %v899 = vrot.slane %v891, 1
      %v900 = vrot.slane %v892, 1
      %v901 = vrot.slane %v893, 1
      %v902 = vrot.slane %v894, 1
      %v903 = vrot.slane %v895, 1
      %v904 = vrot.slane %v896, 1
      %v905 = vrot.slane %v897, 1
      %v906 = vrot.slane %v898, 1
      %907 = vrot.lane.b32.xlu0 %v899, 8
      %v908 = vpop.permute.xlu0 %907
      %909 = vrot.lane.b32.xlu0 %v900, 8
      %v910 = vpop.permute.xlu0 %909
      %911 = vrot.lane.b32.xlu0 %v901, 8
      %v912 = vpop.permute.xlu0 %911
      %913 = vrot.lane.b32.xlu0 %v902, 8
      %v914 = vpop.permute.xlu0 %913
      %915 = vrot.lane.b32.xlu0 %v903, 8
      %v916 = vpop.permute.xlu0 %915
      %917 = vrot.lane.b32.xlu0 %v904, 8
      %v918 = vpop.permute.xlu0 %917
      %919 = vrot.lane.b32.xlu0 %v905, 8
      %v920 = vpop.permute.xlu0 %919
      %921 = vrot.lane.b32.xlu0 %v906, 8
      %v922 = vpop.permute.xlu0 %921
      %v931 = vunpack.c.l.b16 %v714
      %v932 = vunpack.c.l.b16 %v715
      %v933 = vunpack.c.l.b16 %v716
      %v934 = vunpack.c.l.b16 %v717
      %v935 = vunpack.c.l.b16 %v718
      %v936 = vunpack.c.l.b16 %v719
      %v937 = vunpack.c.l.b16 %v720
      %v938 = vunpack.c.l.b16 %v721
      %v939 = vpack.c.b16 %v931, %v931
      %v940 = vpack.c.b16 %v932, %v932
      %v941 = vpack.c.b16 %v933, %v933
      %v942 = vpack.c.b16 %v934, %v934
      %v943 = vpack.c.b16 %v935, %v935
      %v944 = vpack.c.b16 %v936, %v936
      %v945 = vpack.c.b16 %v937, %v937
      %v946 = vpack.c.b16 %v938, %v938
      %947 = vrot.lane.b32.xlu0 %v939, 12
      %v948 = vpop.permute.xlu0 %947
      %949 = vrot.lane.b32.xlu0 %v940, 12
      %v950 = vpop.permute.xlu0 %949
      %951 = vrot.lane.b32.xlu0 %v941, 12
      %v952 = vpop.permute.xlu0 %951
      %953 = vrot.lane.b32.xlu0 %v942, 12
      %v954 = vpop.permute.xlu0 %953
      %955 = vrot.lane.b32.xlu0 %v943, 12
      %v956 = vpop.permute.xlu0 %955
      %957 = vrot.lane.b32.xlu0 %v944, 12
      %v958 = vpop.permute.xlu0 %957
      %959 = vrot.lane.b32.xlu0 %v945, 12
      %v960 = vpop.permute.xlu0 %959
      %961 = vrot.lane.b32.xlu0 %v946, 12
      %v962 = vpop.permute.xlu0 %961
      %v971 = vunpack.c.l.b16 %v722
      %v972 = vunpack.c.l.b16 %v723
      %v973 = vunpack.c.l.b16 %v724
      %v974 = vunpack.c.l.b16 %v725
      %v975 = vunpack.c.l.b16 %v726
      %v976 = vunpack.c.l.b16 %v727
      %v977 = vunpack.c.l.b16 %v728
      %v978 = vunpack.c.l.b16 %v729
      %v979 = vpack.c.b16 %v971, %v931
      %v980 = vpack.c.b16 %v972, %v932
      %v981 = vpack.c.b16 %v973, %v933
      %v982 = vpack.c.b16 %v974, %v934
      %v983 = vpack.c.b16 %v975, %v935
      %v984 = vpack.c.b16 %v976, %v936
      %v985 = vpack.c.b16 %v977, %v937
      %v986 = vpack.c.b16 %v978, %v938
      %v988 = vshrl.u32 %v979, 16
      %v990 = vshll.u32 %v979, 16
      %v992 = vrot.slane %v990, 1
      %v993 = vor.u32 %v988, %v992
      %v995 = vshrl.u32 %v980, 16
      %v997 = vshll.u32 %v980, 16
      %v999 = vrot.slane %v997, 1
      %v1000 = vor.u32 %v995, %v999
      %v1002 = vshrl.u32 %v981, 16
      %v1004 = vshll.u32 %v981, 16
      %v1006 = vrot.slane %v1004, 1
      %v1007 = vor.u32 %v1002, %v1006
      %v1009 = vshrl.u32 %v982, 16
      %v1011 = vshll.u32 %v982, 16
      %v1013 = vrot.slane %v1011, 1
      %v1014 = vor.u32 %v1009, %v1013
      %v1016 = vshrl.u32 %v983, 16
      %v1018 = vshll.u32 %v983, 16
      %v1020 = vrot.slane %v1018, 1
      %v1021 = vor.u32 %v1016, %v1020
      %v1023 = vshrl.u32 %v984, 16
      %v1025 = vshll.u32 %v984, 16
      %v1027 = vrot.slane %v1025, 1
      %v1028 = vor.u32 %v1023, %v1027
      %v1030 = vshrl.u32 %v985, 16
      %v1032 = vshll.u32 %v985, 16
      %v1034 = vrot.slane %v1032, 1
      %v1035 = vor.u32 %v1030, %v1034
      %v1037 = vshrl.u32 %v986, 16
      %v1039 = vshll.u32 %v986, 16
      %v1041 = vrot.slane %v1039, 1
      %v1042 = vor.u32 %v1037, %v1041
      %1043 = vrot.lane.b32.xlu0 %v993, 16
      %v1044 = vpop.permute.xlu0 %1043
      %1045 = vrot.lane.b32.xlu0 %v1000, 16
      %v1046 = vpop.permute.xlu0 %1045
      %1047 = vrot.lane.b32.xlu0 %v1007, 16
      %v1048 = vpop.permute.xlu0 %1047
      %1049 = vrot.lane.b32.xlu0 %v1014, 16
      %v1050 = vpop.permute.xlu0 %1049
      %1051 = vrot.lane.b32.xlu0 %v1021, 16
      %v1052 = vpop.permute.xlu0 %1051
      %1053 = vrot.lane.b32.xlu0 %v1028, 16
      %v1054 = vpop.permute.xlu0 %1053
      %1055 = vrot.lane.b32.xlu0 %v1035, 16
      %v1056 = vpop.permute.xlu0 %1055
      %1057 = vrot.lane.b32.xlu0 %v1042, 16
      %v1058 = vpop.permute.xlu0 %1057
      %v1067 = vunpack.c.l.b16 %v730
      %v1068 = vunpack.c.l.b16 %v731
      %v1069 = vunpack.c.l.b16 %v732
      %v1070 = vunpack.c.l.b16 %v733
      %v1071 = vunpack.c.l.b16 %v734
      %v1072 = vunpack.c.l.b16 %v735
      %v1073 = vunpack.c.l.b16 %v736
      %v1074 = vunpack.c.l.b16 %v737
      %v1075 = vpack.c.b16 %v971, %v1067
      %v1076 = vpack.c.b16 %v972, %v1068
      %v1077 = vpack.c.b16 %v973, %v1069
      %v1078 = vpack.c.b16 %v974, %v1070
      %v1079 = vpack.c.b16 %v975, %v1071
      %v1080 = vpack.c.b16 %v976, %v1072
      %v1081 = vpack.c.b16 %v977, %v1073
      %v1082 = vpack.c.b16 %v978, %v1074
      %v1083 = vrot.slane %v1075, 1
      %v1084 = vrot.slane %v1076, 1
      %v1085 = vrot.slane %v1077, 1
      %v1086 = vrot.slane %v1078, 1
      %v1087 = vrot.slane %v1079, 1
      %v1088 = vrot.slane %v1080, 1
      %v1089 = vrot.slane %v1081, 1
      %v1090 = vrot.slane %v1082, 1
      %1091 = vrot.lane.b32.xlu0 %v1083, 20
      %v1092 = vpop.permute.xlu0 %1091
      %1093 = vrot.lane.b32.xlu0 %v1084, 20
      %v1094 = vpop.permute.xlu0 %1093
      %1095 = vrot.lane.b32.xlu0 %v1085, 20
      %v1096 = vpop.permute.xlu0 %1095
      %1097 = vrot.lane.b32.xlu0 %v1086, 20
      %v1098 = vpop.permute.xlu0 %1097
      %1099 = vrot.lane.b32.xlu0 %v1087, 20
      %v1100 = vpop.permute.xlu0 %1099
      %1101 = vrot.lane.b32.xlu0 %v1088, 20
      %v1102 = vpop.permute.xlu0 %1101
      %1103 = vrot.lane.b32.xlu0 %v1089, 20
      %v1104 = vpop.permute.xlu0 %1103
      %1105 = vrot.lane.b32.xlu0 %v1090, 20
      %v1106 = vpop.permute.xlu0 %1105
      %v1115 = vunpack.c.l.b16 %v739
      %v1116 = vunpack.c.l.b16 %v740
      %v1117 = vunpack.c.l.b16 %v741
      %v1118 = vunpack.c.l.b16 %v742
      %v1119 = vunpack.c.l.b16 %v743
      %v1120 = vunpack.c.l.b16 %v744
      %v1121 = vunpack.c.l.b16 %v745
      %v1122 = vunpack.c.l.b16 %v746
      %v1123 = vpack.c.b16 %v1115, %v1115
      %v1124 = vpack.c.b16 %v1116, %v1116
      %v1125 = vpack.c.b16 %v1117, %v1117
      %v1126 = vpack.c.b16 %v1118, %v1118
      %v1127 = vpack.c.b16 %v1119, %v1119
      %v1128 = vpack.c.b16 %v1120, %v1120
      %v1129 = vpack.c.b16 %v1121, %v1121
      %v1130 = vpack.c.b16 %v1122, %v1122
      %1131 = vrot.lane.b32.xlu0 %v1123, 24
      %v1132 = vpop.permute.xlu0 %1131
      %1133 = vrot.lane.b32.xlu0 %v1124, 24
      %v1134 = vpop.permute.xlu0 %1133
      %1135 = vrot.lane.b32.xlu0 %v1125, 24
      %v1136 = vpop.permute.xlu0 %1135
      %1137 = vrot.lane.b32.xlu0 %v1126, 24
      %v1138 = vpop.permute.xlu0 %1137
      %1139 = vrot.lane.b32.xlu0 %v1127, 24
      %v1140 = vpop.permute.xlu0 %1139
      %1141 = vrot.lane.b32.xlu0 %v1128, 24
      %v1142 = vpop.permute.xlu0 %1141
      %1143 = vrot.lane.b32.xlu0 %v1129, 24
      %v1144 = vpop.permute.xlu0 %1143
      %1145 = vrot.lane.b32.xlu0 %v1130, 24
      %v1146 = vpop.permute.xlu0 %1145
      %v1155 = vunpack.c.l.b16 %v747
      %v1156 = vunpack.c.l.b16 %v748
      %v1157 = vunpack.c.l.b16 %v749
      %v1158 = vunpack.c.l.b16 %v750
      %v1159 = vunpack.c.l.b16 %v751
      %v1160 = vunpack.c.l.b16 %v752
      %v1161 = vunpack.c.l.b16 %v753
      %v1162 = vunpack.c.l.b16 %v754
      %v1163 = vpack.c.b16 %v1155, %v1115
      %v1164 = vpack.c.b16 %v1156, %v1116
      %v1165 = vpack.c.b16 %v1157, %v1117
      %v1166 = vpack.c.b16 %v1158, %v1118
      %v1167 = vpack.c.b16 %v1159, %v1119
      %v1168 = vpack.c.b16 %v1160, %v1120
      %v1169 = vpack.c.b16 %v1161, %v1121
      %v1170 = vpack.c.b16 %v1162, %v1122
      %v1172 = vshrl.u32 %v1163, 16
      %v1174 = vshll.u32 %v1163, 16
      %v1176 = vrot.slane %v1174, 1
      %v1177 = vor.u32 %v1172, %v1176
      %v1179 = vshrl.u32 %v1164, 16
      %v1181 = vshll.u32 %v1164, 16
      %v1183 = vrot.slane %v1181, 1
      %v1184 = vor.u32 %v1179, %v1183
      %v1186 = vshrl.u32 %v1165, 16
      %v1188 = vshll.u32 %v1165, 16
      %v1190 = vrot.slane %v1188, 1
      %v1191 = vor.u32 %v1186, %v1190
      %v1193 = vshrl.u32 %v1166, 16
      %v1195 = vshll.u32 %v1166, 16
      %v1197 = vrot.slane %v1195, 1
      %v1198 = vor.u32 %v1193, %v1197
      %v1200 = vshrl.u32 %v1167, 16
      %v1202 = vshll.u32 %v1167, 16
      %v1204 = vrot.slane %v1202, 1
      %v1205 = vor.u32 %v1200, %v1204
      %v1207 = vshrl.u32 %v1168, 16
      %v1209 = vshll.u32 %v1168, 16
      %v1211 = vrot.slane %v1209, 1
      %v1212 = vor.u32 %v1207, %v1211
      %v1214 = vshrl.u32 %v1169, 16
      %v1216 = vshll.u32 %v1169, 16
      %v1218 = vrot.slane %v1216, 1
      %v1219 = vor.u32 %v1214, %v1218
      %v1221 = vshrl.u32 %v1170, 16
      %v1223 = vshll.u32 %v1170, 16
      %v1225 = vrot.slane %v1223, 1
      %v1226 = vor.u32 %v1221, %v1225
      %1227 = vrot.lane.b32.xlu0 %v1177, 28
      %v1228 = vpop.permute.xlu0 %1227
      %1229 = vrot.lane.b32.xlu0 %v1184, 28
      %v1230 = vpop.permute.xlu0 %1229
      %1231 = vrot.lane.b32.xlu0 %v1191, 28
      %v1232 = vpop.permute.xlu0 %1231
      %1233 = vrot.lane.b32.xlu0 %v1198, 28
      %v1234 = vpop.permute.xlu0 %1233
      %1235 = vrot.lane.b32.xlu0 %v1205, 28
      %v1236 = vpop.permute.xlu0 %1235
      %1237 = vrot.lane.b32.xlu0 %v1212, 28
      %v1238 = vpop.permute.xlu0 %1237
      %1239 = vrot.lane.b32.xlu0 %v1219, 28
      %v1240 = vpop.permute.xlu0 %1239
      %1241 = vrot.lane.b32.xlu0 %v1226, 28
      %v1242 = vpop.permute.xlu0 %1241
      %v1251 = vunpack.c.l.b16 %v755
      %v1252 = vunpack.c.l.b16 %v756
      %v1253 = vunpack.c.l.b16 %v757
      %v1254 = vunpack.c.l.b16 %v758
      %v1255 = vunpack.c.l.b16 %v759
      %v1256 = vunpack.c.l.b16 %v760
      %v1257 = vunpack.c.l.b16 %v761
      %v1258 = vunpack.c.l.b16 %v762
      %v1259 = vpack.c.b16 %v1155, %v1251
      %v1260 = vpack.c.b16 %v1156, %v1252
      %v1261 = vpack.c.b16 %v1157, %v1253
      %v1262 = vpack.c.b16 %v1158, %v1254
      %v1263 = vpack.c.b16 %v1159, %v1255
      %v1264 = vpack.c.b16 %v1160, %v1256
      %v1265 = vpack.c.b16 %v1161, %v1257
      %v1266 = vpack.c.b16 %v1162, %v1258
      %v1267 = vrot.slane %v1259, 1
      %v1268 = vrot.slane %v1260, 1
      %v1269 = vrot.slane %v1261, 1
      %v1270 = vrot.slane %v1262, 1
      %v1271 = vrot.slane %v1263, 1
      %v1272 = vrot.slane %v1264, 1
      %v1273 = vrot.slane %v1265, 1
      %v1274 = vrot.slane %v1266, 1
      %1275 = vrot.lane.b32.xlu0 %v1267, 32
      %v1276 = vpop.permute.xlu0 %1275
      %1277 = vrot.lane.b32.xlu0 %v1268, 32
      %v1278 = vpop.permute.xlu0 %1277
      %1279 = vrot.lane.b32.xlu0 %v1269, 32
      %v1280 = vpop.permute.xlu0 %1279
      %1281 = vrot.lane.b32.xlu0 %v1270, 32
      %v1282 = vpop.permute.xlu0 %1281
      %1283 = vrot.lane.b32.xlu0 %v1271, 32
      %v1284 = vpop.permute.xlu0 %1283
      %1285 = vrot.lane.b32.xlu0 %v1272, 32
      %v1286 = vpop.permute.xlu0 %1285
      %1287 = vrot.lane.b32.xlu0 %v1273, 32
      %v1288 = vpop.permute.xlu0 %1287
      %1289 = vrot.lane.b32.xlu0 %v1274, 32
      %v1290 = vpop.permute.xlu0 %1289
      %vm1291 = vcmask 31744
      %v1294 = vsel %vm1291, %v690, %v860
      %v1297 = vsel %vm1291, %v691, %v862
      %v1300 = vsel %vm1291, %v692, %v864
      %v1303 = vsel %vm1291, %v693, %v866
      %v1306 = vsel %vm1291, %v694, %v868
      %v1309 = vsel %vm1291, %v695, %v870
      %v1312 = vsel %vm1291, %v696, %v872
      %v1315 = vsel %vm1291, %v697, %v874
      %vm1316 = vcmask 64512
      %v1318 = vsel %vm1316, %v1294, %v908
      %v1320 = vsel %vm1316, %v1297, %v910
      %v1322 = vsel %vm1316, %v1300, %v912
      %v1324 = vsel %vm1316, %v1303, %v914
      %v1326 = vsel %vm1316, %v1306, %v916
      %v1328 = vsel %vm1316, %v1309, %v918
      %v1330 = vsel %vm1316, %v1312, %v920
      %v1332 = vsel %vm1316, %v1315, %v922
      %vm1333 = vcmask 97280
      %v1335 = vsel %vm1333, %v1318, %v948
      %v1337 = vsel %vm1333, %v1320, %v950
      %v1339 = vsel %vm1333, %v1322, %v952
      %v1341 = vsel %vm1333, %v1324, %v954
      %v1343 = vsel %vm1333, %v1326, %v956
      %v1345 = vsel %vm1333, %v1328, %v958
      %v1347 = vsel %vm1333, %v1330, %v960
      %v1349 = vsel %vm1333, %v1332, %v962
      %vm1350 = vcmask 130048
      %v1352 = vsel %vm1350, %v1335, %v1044
      %v1354 = vsel %vm1350, %v1337, %v1046
      %v1356 = vsel %vm1350, %v1339, %v1048
      %v1358 = vsel %vm1350, %v1341, %v1050
      %v1360 = vsel %vm1350, %v1343, %v1052
      %v1362 = vsel %vm1350, %v1345, %v1054
      %v1364 = vsel %vm1350, %v1347, %v1056
      %v1366 = vsel %vm1350, %v1349, %v1058
      %vm1367 = vcmask 162816
      %v1369 = vsel %vm1367, %v1352, %v1092
      %v1371 = vsel %vm1367, %v1354, %v1094
      %v1373 = vsel %vm1367, %v1356, %v1096
      %v1375 = vsel %vm1367, %v1358, %v1098
      %v1377 = vsel %vm1367, %v1360, %v1100
      %v1379 = vsel %vm1367, %v1362, %v1102
      %v1381 = vsel %vm1367, %v1364, %v1104
      %v1383 = vsel %vm1367, %v1366, %v1106
      %vm1384 = vcmask 195584
      %v1386 = vsel %vm1384, %v1369, %v1132
      %v1388 = vsel %vm1384, %v1371, %v1134
      %v1390 = vsel %vm1384, %v1373, %v1136
      %v1392 = vsel %vm1384, %v1375, %v1138
      %v1394 = vsel %vm1384, %v1377, %v1140
      %v1396 = vsel %vm1384, %v1379, %v1142
      %v1398 = vsel %vm1384, %v1381, %v1144
      %v1400 = vsel %vm1384, %v1383, %v1146
      %vm1401 = vcmask 228352
      %v1403 = vsel %vm1401, %v1386, %v1228
      %v1405 = vsel %vm1401, %v1388, %v1230
      %v1407 = vsel %vm1401, %v1390, %v1232
      %v1409 = vsel %vm1401, %v1392, %v1234
      %v1411 = vsel %vm1401, %v1394, %v1236
      %v1413 = vsel %vm1401, %v1396, %v1238
      %v1415 = vsel %vm1401, %v1398, %v1240
      %v1417 = vsel %vm1401, %v1400, %v1242
      %vm1418 = vcmask 261120
      %v1420 = vsel %vm1418, %v1403, %v1276
      %v1422 = vsel %vm1418, %v1405, %v1278
      %v1424 = vsel %vm1418, %v1407, %v1280
      %v1426 = vsel %vm1418, %v1409, %v1282
      %v1428 = vsel %vm1418, %v1411, %v1284
      %v1430 = vsel %vm1418, %v1413, %v1286
      %v1432 = vsel %vm1418, %v1415, %v1288
      %v1434 = vsel %vm1418, %v1417, %v1290
      %v1435 = vld [vmem:[%s1] sm:$0xf]
      %v1436 = vld [vmem:[%s1 + $0x4] sm:$0xf]
      %v1437 = vld [vmem:[%s1 + $0x8] sm:$0xf]
      %v1438 = vld [vmem:[%s1 + $0xc] sm:$0xf]
      %v1439 = vld [vmem:[%s1 + $0x10] sm:$0x3]
      %v1448 = vunpack.c.l.b16 %v1420
      %v1449 = vunpack.c.l.b16 %v1422
      %v1450 = vunpack.c.l.b16 %v1424
      %v1451 = vunpack.c.l.b16 %v1426
      %v1452 = vunpack.c.l.b16 %v1428
      %v1453 = vunpack.c.l.b16 %v1430
      %v1454 = vunpack.c.l.b16 %v1432
      %v1455 = vunpack.c.l.b16 %v1434
      %v1456 = vpack.c.b16 %v1449, %v1448
      %v1457 = vpack.c.b16 %v1451, %v1450
      %v1458 = vpack.c.b16 %v1453, %v1452
      %v1459 = vpack.c.b16 %v1455, %v1454
      %v1465 = vunpack.c.l.b16 %v1435
      %v1466 = vunpack.c.l.b16 %v1436
      %v1467 = vunpack.c.l.b16 %v1437
      %v1468 = vunpack.c.l.b16 %v1438
      %v1469 = vunpack.c.l.b16 %v1439
      %v1470 = vpack.c.b16 %v1466, %v1465
      %v1471 = vpack.c.b16 %v1468, %v1467
      %v1472 = vpack.c.b16 %v1469, %v1469
      %vm1475 = vcmask 293888
      %v1477 = vsel %vm1475, %v1456, 0
      %v1480 = vsel %vm1475, %v1457, 0
      %v1483 = vsel %vm1475, %v1458, 0
      %v1486 = vsel %vm1475, %v1459, 0
      %vm1488 = vcmask 1041408
      %v1490 = vsel %vm1488, %v1472, 0
      %1492 = vmatpush.bf16.msra.mxu0 0
      %1493 = vmatpush.bf16.msra.mxu0 0
      %1494 = vmatpush.bf16.msra.mxu0 0
      %1495 = vmatpush.bf16.msra.mxu0 0
      %1496 = vmatpush.bf16.msra.mxu0 0
      %1497 = vmatpush.bf16.msra.mxu0 %v1490
      %1498 = vmatpush.bf16.msra.mxu0 %v1471
      %1499 = vmatpush.bf16.msra.mxu0 %v1470
      %1500 = vmatmul.bf16.gmra.mxu0 %v1477
      %v1501 = vpop.f32.mrf.mxu0
      %v1502 = vadd.f32 0.0, %v1501
      %v1503 = vpop.f32.mrf.mxu0
      %v1504 = vadd.f32 0.0, %v1503
      %1505 = vmatmul.bf16.gmra.mxu0 %v1480
      %v1506 = vpop.f32.mrf.mxu0
      %v1507 = vadd.f32 0.0, %v1506
      %v1508 = vpop.f32.mrf.mxu0
      %v1509 = vadd.f32 0.0, %v1508
      %1510 = vmatmul.bf16.gmra.mxu0 %v1483
      %v1511 = vpop.f32.mrf.mxu0
      %v1512 = vadd.f32 0.0, %v1511
      %v1513 = vpop.f32.mrf.mxu0
      %v1514 = vadd.f32 0.0, %v1513
      %1515 = vmatmul.bf16.gmra.mxu0 %v1486
      %v1516 = vpop.f32.mrf.mxu0
      %v1517 = vadd.f32 0.0, %v1516
      %v1518 = vpop.f32.mrf.mxu0
      %v1519 = vadd.f32 0.0, %v1518
      %1520 = vdwg.mxu0
      %v1521 = vld [vmem:[%s2] sm:$0x1]
      %v1523 = vperm.slane %v1521, 0
      %v1525 = vmul.f32 %v1502, %v1523
      %v1526 = vmul.f32 %v1504, %v1523
      %v1527 = vmul.f32 %v1507, %v1523
      %v1528 = vmul.f32 %v1509, %v1523
      %v1529 = vmul.f32 %v1512, %v1523
      %v1530 = vmul.f32 %v1514, %v1523
      %v1531 = vmul.f32 %v1517, %v1523
      %v1532 = vmul.f32 %v1519, %v1523
      %v1533 = vld [vmem:[%s3] sm:$0x1]
      %v1535 = vperm.slane %v1533, 0
      %v1537 = vadd.f32 %v1525, %v1535
      %v1538 = vadd.f32 %v1526, %v1535
      %v1539 = vadd.f32 %v1527, %v1535
      %v1540 = vadd.f32 %v1528, %v1535
      %v1541 = vadd.f32 %v1529, %v1535
      %v1542 = vadd.f32 %v1530, %v1535
      %v1543 = vadd.f32 %v1531, %v1535
      %v1544 = vadd.f32 %v1532, %v1535
      %v1545 = vmax.f32 %v1537, 0.0
      %v1546 = vmax.f32 %v1538, 0.0
      %v1547 = vmax.f32 %v1539, 0.0
      %v1548 = vmax.f32 %v1540, 0.0
      %v1549 = vmax.f32 %v1541, 0.0
      %v1550 = vmax.f32 %v1542, 0.0
      %v1551 = vmax.f32 %v1543, 0.0
      %v1552 = vmax.f32 %v1544, 0.0
      %v1553 = vpack.c.bf16 %v1545, %v1545
      %v1554 = vpack.c.bf16 %v1546, %v1546
      %v1555 = vpack.c.bf16 %v1547, %v1547
      %v1556 = vpack.c.bf16 %v1548, %v1548
      %v1557 = vpack.c.bf16 %v1549, %v1549
      %v1558 = vpack.c.bf16 %v1550, %v1550
      %v1559 = vpack.c.bf16 %v1551, %v1551
      %v1560 = vpack.c.bf16 %v1552, %v1552
      %v1562 = vshrl.u32 %v1553, 16
      %v1564 = vrot.slane %v1562, 7
      %v1565 = vshll.u32 %v1553, 16
      %v1567 = vor.u32 %v1564, %v1565
      %v1568 = vrot.slane %v1564, 4
      %v1570 = vshrl.u32 %v1554, 16
      %v1572 = vrot.slane %v1570, 7
      %v1573 = vshll.u32 %v1554, 16
      %v1575 = vor.u32 %v1572, %v1573
      %v1576 = vrot.slane %v1572, 4
      %v1578 = vshrl.u32 %v1555, 16
      %v1580 = vrot.slane %v1578, 7
      %v1581 = vshll.u32 %v1555, 16
      %v1583 = vor.u32 %v1580, %v1581
      %v1584 = vrot.slane %v1580, 4
      %v1586 = vshrl.u32 %v1556, 16
      %v1588 = vrot.slane %v1586, 7
      %v1589 = vshll.u32 %v1556, 16
      %v1591 = vor.u32 %v1588, %v1589
      %v1592 = vrot.slane %v1588, 4
      %v1594 = vshrl.u32 %v1557, 16
      %v1596 = vrot.slane %v1594, 7
      %v1597 = vshll.u32 %v1557, 16
      %v1599 = vor.u32 %v1596, %v1597
      %v1600 = vrot.slane %v1596, 4
      %v1602 = vshrl.u32 %v1558, 16
      %v1604 = vrot.slane %v1602, 7
      %v1605 = vshll.u32 %v1558, 16
      %v1607 = vor.u32 %v1604, %v1605
      %v1608 = vrot.slane %v1604, 4
      %v1610 = vshrl.u32 %v1559, 16
      %v1612 = vrot.slane %v1610, 7
      %v1613 = vshll.u32 %v1559, 16
      %v1615 = vor.u32 %v1612, %v1613
      %v1616 = vrot.slane %v1612, 4
      %v1618 = vshrl.u32 %v1560, 16
      %v1620 = vrot.slane %v1618, 7
      %v1621 = vshll.u32 %v1560, 16
      %v1623 = vor.u32 %v1620, %v1621
      %v1624 = vrot.slane %v1620, 4
      %vm1641 = vcmask 60416
      %vm1642 = vmand %vm1641, %vm475
      %v1643 = vld [vmem:[%s508] sm:$0xf]
      %v1644 = vsel %vm1642, %v1567, %v1643
      %1645 = vst [vmem:[%s508] sm:$0xf] %v1644
      %v1646 = vld [vmem:[%s508 + $0x4] sm:$0x1]
      %v1647 = vsel %vm510, %v1568, %v1646
      %1648 = vst [vmem:[%s508 + $0x4] sm:$0x1] %v1647
      %v1649 = vld [vmem:[%s508 + $0x8] sm:$0xf]
      %v1650 = vsel %vm1642, %v1575, %v1649
      %1651 = vst [vmem:[%s508 + $0x8] sm:$0xf] %v1650
      %v1652 = vld [vmem:[%s508 + $0xc] sm:$0x1]
      %v1653 = vsel %vm510, %v1576, %v1652
      %1654 = vst [vmem:[%s508 + $0xc] sm:$0x1] %v1653
      %v1655 = vld [vmem:[%s508 + $0x10] sm:$0xf]
      %v1656 = vsel %vm1642, %v1583, %v1655
      %1657 = vst [vmem:[%s508 + $0x10] sm:$0xf] %v1656
      %v1658 = vld [vmem:[%s508 + $0x14] sm:$0x1]
      %v1659 = vsel %vm510, %v1584, %v1658
      %1660 = vst [vmem:[%s508 + $0x14] sm:$0x1] %v1659
      %v1661 = vld [vmem:[%s508 + $0x18] sm:$0xf]
      %v1662 = vsel %vm1642, %v1591, %v1661
      %1663 = vst [vmem:[%s508 + $0x18] sm:$0xf] %v1662
      %v1664 = vld [vmem:[%s508 + $0x1c] sm:$0x1]
      %v1665 = vsel %vm510, %v1592, %v1664
      %1666 = vst [vmem:[%s508 + $0x1c] sm:$0x1] %v1665
      %v1667 = vld [vmem:[%s508 + $0x20] sm:$0xf]
      %v1668 = vsel %vm1642, %v1599, %v1667
      %1669 = vst [vmem:[%s508 + $0x20] sm:$0xf] %v1668
      %v1670 = vld [vmem:[%s508 + $0x24] sm:$0x1]
      %v1671 = vsel %vm510, %v1600, %v1670
      %1672 = vst [vmem:[%s508 + $0x24] sm:$0x1] %v1671
      %v1673 = vld [vmem:[%s508 + $0x28] sm:$0xf]
      %v1674 = vsel %vm1642, %v1607, %v1673
      %1675 = vst [vmem:[%s508 + $0x28] sm:$0xf] %v1674
      %v1676 = vld [vmem:[%s508 + $0x2c] sm:$0x1]
      %v1677 = vsel %vm510, %v1608, %v1676
      %1678 = vst [vmem:[%s508 + $0x2c] sm:$0x1] %v1677
      %v1679 = vld [vmem:[%s508 + $0x30] sm:$0xf]
      %v1680 = vsel %vm1642, %v1615, %v1679
      %1681 = vst [vmem:[%s508 + $0x30] sm:$0xf] %v1680
      %v1682 = vld [vmem:[%s508 + $0x34] sm:$0x1]
      %v1683 = vsel %vm510, %v1616, %v1682
      %1684 = vst [vmem:[%s508 + $0x34] sm:$0x1] %v1683
      %v1685 = vld [vmem:[%s508 + $0x38] sm:$0xf]
      %v1686 = vsel %vm1642, %v1623, %v1685
      %1687 = vst [vmem:[%s508 + $0x38] sm:$0xf] %v1686
      %v1688 = vld [vmem:[%s508 + $0x3c] sm:$0x1]
      %v1689 = vsel %vm510, %v1624, %v1688
      %1690 = vst [vmem:[%s508 + $0x3c] sm:$0x1] %v1689
      %v1691 = vld [vmem:[#allocation3] sm:$0xf]
      %v1692 = vld [vmem:[#allocation3 + $0x8] sm:$0xf]
      %v1693 = vld [vmem:[#allocation3 + $0x10] sm:$0xf]
      %v1694 = vld [vmem:[#allocation3 + $0x18] sm:$0xf]
      %v1695 = vld [vmem:[#allocation3 + $0x20] sm:$0xf]
      %v1696 = vld [vmem:[#allocation3 + $0x28] sm:$0xf]
      %v1697 = vld [vmem:[#allocation3 + $0x30] sm:$0xf]
      %v1698 = vld [vmem:[#allocation3 + $0x38] sm:$0xf]
      %v1699 = vld [vmem:[#allocation3 + $0x4] sm:$0x1]
      %v1700 = vld [vmem:[#allocation3 + $0xc] sm:$0x1]
      %v1701 = vld [vmem:[#allocation3 + $0x14] sm:$0x1]
      %v1702 = vld [vmem:[#allocation3 + $0x1c] sm:$0x1]
      %v1703 = vld [vmem:[#allocation3 + $0x24] sm:$0x1]
      %v1704 = vld [vmem:[#allocation3 + $0x2c] sm:$0x1]
      %v1705 = vld [vmem:[#allocation3 + $0x34] sm:$0x1]
      %v1706 = vld [vmem:[#allocation3 + $0x3c] sm:$0x1]
      %v1707 = vld [vmem:[#allocation3] sm:$0xe]
      %v1708 = vld [vmem:[#allocation3 + $0x8] sm:$0xe]
      %v1709 = vld [vmem:[#allocation3 + $0x10] sm:$0xe]
      %v1710 = vld [vmem:[#allocation3 + $0x18] sm:$0xe]
      %v1711 = vld [vmem:[#allocation3 + $0x20] sm:$0xe]
      %v1712 = vld [vmem:[#allocation3 + $0x28] sm:$0xe]
      %v1713 = vld [vmem:[#allocation3 + $0x30] sm:$0xe]
      %v1714 = vld [vmem:[#allocation3 + $0x38] sm:$0xe]
      %v1715 = vld [vmem:[%s508] sm:$0xf]
      %v1716 = vld [vmem:[%s508 + $0x8] sm:$0xf]
      %v1717 = vld [vmem:[%s508 + $0x10] sm:$0xf]
      %v1718 = vld [vmem:[%s508 + $0x18] sm:$0xf]
      %v1719 = vld [vmem:[%s508 + $0x20] sm:$0xf]
      %v1720 = vld [vmem:[%s508 + $0x28] sm:$0xf]
      %v1721 = vld [vmem:[%s508 + $0x30] sm:$0xf]
      %v1722 = vld [vmem:[%s508 + $0x38] sm:$0xf]
      %v1723 = vld [vmem:[%s508 + $0x4] sm:$0x1]
      %v1724 = vld [vmem:[%s508 + $0xc] sm:$0x1]
      %v1725 = vld [vmem:[%s508 + $0x14] sm:$0x1]
      %v1726 = vld [vmem:[%s508 + $0x1c] sm:$0x1]
      %v1727 = vld [vmem:[%s508 + $0x24] sm:$0x1]
      %v1728 = vld [vmem:[%s508 + $0x2c] sm:$0x1]
      %v1729 = vld [vmem:[%s508 + $0x34] sm:$0x1]
      %v1730 = vld [vmem:[%s508 + $0x3c] sm:$0x1]
      %v1731 = vld [vmem:[%s508] sm:$0xe]
      %v1732 = vld [vmem:[%s508 + $0x8] sm:$0xe]
      %v1733 = vld [vmem:[%s508 + $0x10] sm:$0xe]
      %v1734 = vld [vmem:[%s508 + $0x18] sm:$0xe]
      %v1735 = vld [vmem:[%s508 + $0x20] sm:$0xe]
      %v1736 = vld [vmem:[%s508 + $0x28] sm:$0xe]
      %v1737 = vld [vmem:[%s508 + $0x30] sm:$0xe]
      %v1738 = vld [vmem:[%s508 + $0x38] sm:$0xe]
      %s1739 = scalar_lea.vmem [#allocation3], 16
      %v1740 = vld [vmem:[%s1739] sm:$0xf]
      %v1741 = vld [vmem:[%s1739 + $0x8] sm:$0xf]
      %v1742 = vld [vmem:[%s1739 + $0x10] sm:$0xf]
      %v1743 = vld [vmem:[%s1739 + $0x18] sm:$0xf]
      %v1744 = vld [vmem:[%s1739 + $0x20] sm:$0xf]
      %v1745 = vld [vmem:[%s1739 + $0x28] sm:$0xf]
      %v1746 = vld [vmem:[%s1739 + $0x30] sm:$0xf]
      %v1747 = vld [vmem:[%s1739 + $0x38] sm:$0xf]
      %v1748 = vld [vmem:[%s1739 + $0x4] sm:$0x1]
      %v1749 = vld [vmem:[%s1739 + $0xc] sm:$0x1]
      %v1750 = vld [vmem:[%s1739 + $0x14] sm:$0x1]
      %v1751 = vld [vmem:[%s1739 + $0x1c] sm:$0x1]
      %v1752 = vld [vmem:[%s1739 + $0x24] sm:$0x1]
      %v1753 = vld [vmem:[%s1739 + $0x2c] sm:$0x1]
      %v1754 = vld [vmem:[%s1739 + $0x34] sm:$0x1]
      %v1755 = vld [vmem:[%s1739 + $0x3c] sm:$0x1]
      %v1756 = vld [vmem:[%s1739] sm:$0xe]
      %v1757 = vld [vmem:[%s1739 + $0x8] sm:$0xe]
      %v1758 = vld [vmem:[%s1739 + $0x10] sm:$0xe]
      %v1759 = vld [vmem:[%s1739 + $0x18] sm:$0xe]
      %v1760 = vld [vmem:[%s1739 + $0x20] sm:$0xe]
      %v1761 = vld [vmem:[%s1739 + $0x28] sm:$0xe]
      %v1762 = vld [vmem:[%s1739 + $0x30] sm:$0xe]
      %v1763 = vld [vmem:[%s1739 + $0x38] sm:$0xe]
      %v1780 = vunpack.c.l.b16 %v1691
      %v1781 = vunpack.c.l.b16 %v1699
      %v1782 = vunpack.c.l.b16 %v1692
      %v1783 = vunpack.c.l.b16 %v1700
      %v1784 = vunpack.c.l.b16 %v1693
      %v1785 = vunpack.c.l.b16 %v1701
      %v1786 = vunpack.c.l.b16 %v1694
      %v1787 = vunpack.c.l.b16 %v1702
      %v1788 = vunpack.c.l.b16 %v1695
      %v1789 = vunpack.c.l.b16 %v1703
      %v1790 = vunpack.c.l.b16 %v1696
      %v1791 = vunpack.c.l.b16 %v1704
      %v1792 = vunpack.c.l.b16 %v1697
      %v1793 = vunpack.c.l.b16 %v1705
      %v1794 = vunpack.c.l.b16 %v1698
      %v1795 = vunpack.c.l.b16 %v1706
      %v1796 = vpack.c.b16 %v1781, %v1780
      %v1797 = vpack.c.b16 %v1783, %v1782
      %v1798 = vpack.c.b16 %v1785, %v1784
      %v1799 = vpack.c.b16 %v1787, %v1786
      %v1800 = vpack.c.b16 %v1789, %v1788
      %v1801 = vpack.c.b16 %v1791, %v1790
      %v1802 = vpack.c.b16 %v1793, %v1792
      %v1803 = vpack.c.b16 %v1795, %v1794
      %v1805 = vshrl.u32 %v1796, 16
      %v1807 = vshll.u32 %v1796, 16
      %v1809 = vrot.slane %v1807, 1
      %v1810 = vor.u32 %v1805, %v1809
      %v1812 = vshrl.u32 %v1797, 16
      %v1814 = vshll.u32 %v1797, 16
      %v1816 = vrot.slane %v1814, 1
      %v1817 = vor.u32 %v1812, %v1816
      %v1819 = vshrl.u32 %v1798, 16
      %v1821 = vshll.u32 %v1798, 16
      %v1823 = vrot.slane %v1821, 1
      %v1824 = vor.u32 %v1819, %v1823
      %v1826 = vshrl.u32 %v1799, 16
      %v1828 = vshll.u32 %v1799, 16
      %v1830 = vrot.slane %v1828, 1
      %v1831 = vor.u32 %v1826, %v1830
      %v1833 = vshrl.u32 %v1800, 16
      %v1835 = vshll.u32 %v1800, 16
      %v1837 = vrot.slane %v1835, 1
      %v1838 = vor.u32 %v1833, %v1837
      %v1840 = vshrl.u32 %v1801, 16
      %v1842 = vshll.u32 %v1801, 16
      %v1844 = vrot.slane %v1842, 1
      %v1845 = vor.u32 %v1840, %v1844
      %v1847 = vshrl.u32 %v1802, 16
      %v1849 = vshll.u32 %v1802, 16
      %v1851 = vrot.slane %v1849, 1
      %v1852 = vor.u32 %v1847, %v1851
      %v1854 = vshrl.u32 %v1803, 16
      %v1856 = vshll.u32 %v1803, 16
      %v1858 = vrot.slane %v1856, 1
      %v1859 = vor.u32 %v1854, %v1858
      %1860 = vrot.lane.b32.xlu0 %v1810, 8
      %v1861 = vpop.permute.xlu0 %1860
      %1862 = vrot.lane.b32.xlu0 %v1817, 8
      %v1863 = vpop.permute.xlu0 %1862
      %1864 = vrot.lane.b32.xlu0 %v1824, 8
      %v1865 = vpop.permute.xlu0 %1864
      %1866 = vrot.lane.b32.xlu0 %v1831, 8
      %v1867 = vpop.permute.xlu0 %1866
      %1868 = vrot.lane.b32.xlu0 %v1838, 8
      %v1869 = vpop.permute.xlu0 %1868
      %1870 = vrot.lane.b32.xlu0 %v1845, 8
      %v1871 = vpop.permute.xlu0 %1870
      %1872 = vrot.lane.b32.xlu0 %v1852, 8
      %v1873 = vpop.permute.xlu0 %1872
      %1874 = vrot.lane.b32.xlu0 %v1859, 8
      %v1875 = vpop.permute.xlu0 %1874
      %v1884 = vunpack.c.l.b16 %v1707
      %v1885 = vunpack.c.l.b16 %v1708
      %v1886 = vunpack.c.l.b16 %v1709
      %v1887 = vunpack.c.l.b16 %v1710
      %v1888 = vunpack.c.l.b16 %v1711
      %v1889 = vunpack.c.l.b16 %v1712
      %v1890 = vunpack.c.l.b16 %v1713
      %v1891 = vunpack.c.l.b16 %v1714
      %v1892 = vpack.c.b16 %v1781, %v1884
      %v1893 = vpack.c.b16 %v1783, %v1885
      %v1894 = vpack.c.b16 %v1785, %v1886
      %v1895 = vpack.c.b16 %v1787, %v1887
      %v1896 = vpack.c.b16 %v1789, %v1888
      %v1897 = vpack.c.b16 %v1791, %v1889
      %v1898 = vpack.c.b16 %v1793, %v1890
      %v1899 = vpack.c.b16 %v1795, %v1891
      %v1900 = vrot.slane %v1892, 1
      %v1901 = vrot.slane %v1893, 1
      %v1902 = vrot.slane %v1894, 1
      %v1903 = vrot.slane %v1895, 1
      %v1904 = vrot.slane %v1896, 1
      %v1905 = vrot.slane %v1897, 1
      %v1906 = vrot.slane %v1898, 1
      %v1907 = vrot.slane %v1899, 1
      %1908 = vrot.lane.b32.xlu0 %v1900, 16
      %v1909 = vpop.permute.xlu0 %1908
      %1910 = vrot.lane.b32.xlu0 %v1901, 16
      %v1911 = vpop.permute.xlu0 %1910
      %1912 = vrot.lane.b32.xlu0 %v1902, 16
      %v1913 = vpop.permute.xlu0 %1912
      %1914 = vrot.lane.b32.xlu0 %v1903, 16
      %v1915 = vpop.permute.xlu0 %1914
      %1916 = vrot.lane.b32.xlu0 %v1904, 16
      %v1917 = vpop.permute.xlu0 %1916
      %1918 = vrot.lane.b32.xlu0 %v1905, 16
      %v1919 = vpop.permute.xlu0 %1918
      %1920 = vrot.lane.b32.xlu0 %v1906, 16
      %v1921 = vpop.permute.xlu0 %1920
      %1922 = vrot.lane.b32.xlu0 %v1907, 16
      %v1923 = vpop.permute.xlu0 %1922
      %v1932 = vunpack.c.l.b16 %v1715
      %v1933 = vunpack.c.l.b16 %v1716
      %v1934 = vunpack.c.l.b16 %v1717
      %v1935 = vunpack.c.l.b16 %v1718
      %v1936 = vunpack.c.l.b16 %v1719
      %v1937 = vunpack.c.l.b16 %v1720
      %v1938 = vunpack.c.l.b16 %v1721
      %v1939 = vunpack.c.l.b16 %v1722
      %v1940 = vpack.c.b16 %v1932, %v1932
      %v1941 = vpack.c.b16 %v1933, %v1933
      %v1942 = vpack.c.b16 %v1934, %v1934
      %v1943 = vpack.c.b16 %v1935, %v1935
      %v1944 = vpack.c.b16 %v1936, %v1936
      %v1945 = vpack.c.b16 %v1937, %v1937
      %v1946 = vpack.c.b16 %v1938, %v1938
      %v1947 = vpack.c.b16 %v1939, %v1939
      %1948 = vrot.lane.b32.xlu0 %v1940, 24
      %v1949 = vpop.permute.xlu0 %1948
      %1950 = vrot.lane.b32.xlu0 %v1941, 24
      %v1951 = vpop.permute.xlu0 %1950
      %1952 = vrot.lane.b32.xlu0 %v1942, 24
      %v1953 = vpop.permute.xlu0 %1952
      %1954 = vrot.lane.b32.xlu0 %v1943, 24
      %v1955 = vpop.permute.xlu0 %1954
      %1956 = vrot.lane.b32.xlu0 %v1944, 24
      %v1957 = vpop.permute.xlu0 %1956
      %1958 = vrot.lane.b32.xlu0 %v1945, 24
      %v1959 = vpop.permute.xlu0 %1958
      %1960 = vrot.lane.b32.xlu0 %v1946, 24
      %v1961 = vpop.permute.xlu0 %1960
      %1962 = vrot.lane.b32.xlu0 %v1947, 24
      %v1963 = vpop.permute.xlu0 %1962
      %v1972 = vunpack.c.l.b16 %v1723
      %v1973 = vunpack.c.l.b16 %v1724
      %v1974 = vunpack.c.l.b16 %v1725
      %v1975 = vunpack.c.l.b16 %v1726
      %v1976 = vunpack.c.l.b16 %v1727
      %v1977 = vunpack.c.l.b16 %v1728
      %v1978 = vunpack.c.l.b16 %v1729
      %v1979 = vunpack.c.l.b16 %v1730
      %v1980 = vpack.c.b16 %v1972, %v1932
      %v1981 = vpack.c.b16 %v1973, %v1933
      %v1982 = vpack.c.b16 %v1974, %v1934
      %v1983 = vpack.c.b16 %v1975, %v1935
      %v1984 = vpack.c.b16 %v1976, %v1936
      %v1985 = vpack.c.b16 %v1977, %v1937
      %v1986 = vpack.c.b16 %v1978, %v1938
      %v1987 = vpack.c.b16 %v1979, %v1939
      %v1989 = vshrl.u32 %v1980, 16
      %v1991 = vshll.u32 %v1980, 16
      %v1993 = vrot.slane %v1991, 1
      %v1994 = vor.u32 %v1989, %v1993
      %v1996 = vshrl.u32 %v1981, 16
      %v1998 = vshll.u32 %v1981, 16
      %v2000 = vrot.slane %v1998, 1
      %v2001 = vor.u32 %v1996, %v2000
      %v2003 = vshrl.u32 %v1982, 16
      %v2005 = vshll.u32 %v1982, 16
      %v2007 = vrot.slane %v2005, 1
      %v2008 = vor.u32 %v2003, %v2007
      %v2010 = vshrl.u32 %v1983, 16
      %v2012 = vshll.u32 %v1983, 16
      %v2014 = vrot.slane %v2012, 1
      %v2015 = vor.u32 %v2010, %v2014
      %v2017 = vshrl.u32 %v1984, 16
      %v2019 = vshll.u32 %v1984, 16
      %v2021 = vrot.slane %v2019, 1
      %v2022 = vor.u32 %v2017, %v2021
      %v2024 = vshrl.u32 %v1985, 16
      %v2026 = vshll.u32 %v1985, 16
      %v2028 = vrot.slane %v2026, 1
      %v2029 = vor.u32 %v2024, %v2028
      %v2031 = vshrl.u32 %v1986, 16
      %v2033 = vshll.u32 %v1986, 16
      %v2035 = vrot.slane %v2033, 1
      %v2036 = vor.u32 %v2031, %v2035
      %v2038 = vshrl.u32 %v1987, 16
      %v2040 = vshll.u32 %v1987, 16
      %v2042 = vrot.slane %v2040, 1
      %v2043 = vor.u32 %v2038, %v2042
      %2044 = vrot.lane.b32.xlu0 %v1994, 32
      %v2045 = vpop.permute.xlu0 %2044
      %2046 = vrot.lane.b32.xlu0 %v2001, 32
      %v2047 = vpop.permute.xlu0 %2046
      %2048 = vrot.lane.b32.xlu0 %v2008, 32
      %v2049 = vpop.permute.xlu0 %2048
      %2050 = vrot.lane.b32.xlu0 %v2015, 32
      %v2051 = vpop.permute.xlu0 %2050
      %2052 = vrot.lane.b32.xlu0 %v2022, 32
      %v2053 = vpop.permute.xlu0 %2052
      %2054 = vrot.lane.b32.xlu0 %v2029, 32
      %v2055 = vpop.permute.xlu0 %2054
      %2056 = vrot.lane.b32.xlu0 %v2036, 32
      %v2057 = vpop.permute.xlu0 %2056
      %2058 = vrot.lane.b32.xlu0 %v2043, 32
      %v2059 = vpop.permute.xlu0 %2058
      %v2068 = vunpack.c.l.b16 %v1731
      %v2069 = vunpack.c.l.b16 %v1732
      %v2070 = vunpack.c.l.b16 %v1733
      %v2071 = vunpack.c.l.b16 %v1734
      %v2072 = vunpack.c.l.b16 %v1735
      %v2073 = vunpack.c.l.b16 %v1736
      %v2074 = vunpack.c.l.b16 %v1737
      %v2075 = vunpack.c.l.b16 %v1738
      %v2076 = vpack.c.b16 %v1972, %v2068
      %v2077 = vpack.c.b16 %v1973, %v2069
      %v2078 = vpack.c.b16 %v1974, %v2070
      %v2079 = vpack.c.b16 %v1975, %v2071
      %v2080 = vpack.c.b16 %v1976, %v2072
      %v2081 = vpack.c.b16 %v1977, %v2073
      %v2082 = vpack.c.b16 %v1978, %v2074
      %v2083 = vpack.c.b16 %v1979, %v2075
      %v2084 = vrot.slane %v2076, 1
      %v2085 = vrot.slane %v2077, 1
      %v2086 = vrot.slane %v2078, 1
      %v2087 = vrot.slane %v2079, 1
      %v2088 = vrot.slane %v2080, 1
      %v2089 = vrot.slane %v2081, 1
      %v2090 = vrot.slane %v2082, 1
      %v2091 = vrot.slane %v2083, 1
      %2092 = vrot.lane.b32.xlu0 %v2084, 40
      %v2093 = vpop.permute.xlu0 %2092
      %2094 = vrot.lane.b32.xlu0 %v2085, 40
      %v2095 = vpop.permute.xlu0 %2094
      %2096 = vrot.lane.b32.xlu0 %v2086, 40
      %v2097 = vpop.permute.xlu0 %2096
      %2098 = vrot.lane.b32.xlu0 %v2087, 40
      %v2099 = vpop.permute.xlu0 %2098
      %2100 = vrot.lane.b32.xlu0 %v2088, 40
      %v2101 = vpop.permute.xlu0 %2100
      %2102 = vrot.lane.b32.xlu0 %v2089, 40
      %v2103 = vpop.permute.xlu0 %2102
      %2104 = vrot.lane.b32.xlu0 %v2090, 40
      %v2105 = vpop.permute.xlu0 %2104
      %2106 = vrot.lane.b32.xlu0 %v2091, 40
      %v2107 = vpop.permute.xlu0 %2106
      %v2116 = vunpack.c.l.b16 %v1740
      %v2117 = vunpack.c.l.b16 %v1741
      %v2118 = vunpack.c.l.b16 %v1742
      %v2119 = vunpack.c.l.b16 %v1743
      %v2120 = vunpack.c.l.b16 %v1744
      %v2121 = vunpack.c.l.b16 %v1745
      %v2122 = vunpack.c.l.b16 %v1746
      %v2123 = vunpack.c.l.b16 %v1747
      %v2124 = vpack.c.b16 %v2116, %v2116
      %v2125 = vpack.c.b16 %v2117, %v2117
      %v2126 = vpack.c.b16 %v2118, %v2118
      %v2127 = vpack.c.b16 %v2119, %v2119
      %v2128 = vpack.c.b16 %v2120, %v2120
      %v2129 = vpack.c.b16 %v2121, %v2121
      %v2130 = vpack.c.b16 %v2122, %v2122
      %v2131 = vpack.c.b16 %v2123, %v2123
      %2132 = vrot.lane.b32.xlu0 %v2124, 48
      %v2133 = vpop.permute.xlu0 %2132
      %2134 = vrot.lane.b32.xlu0 %v2125, 48
      %v2135 = vpop.permute.xlu0 %2134
      %2136 = vrot.lane.b32.xlu0 %v2126, 48
      %v2137 = vpop.permute.xlu0 %2136
      %2138 = vrot.lane.b32.xlu0 %v2127, 48
      %v2139 = vpop.permute.xlu0 %2138
      %2140 = vrot.lane.b32.xlu0 %v2128, 48
      %v2141 = vpop.permute.xlu0 %2140
      %2142 = vrot.lane.b32.xlu0 %v2129, 48
      %v2143 = vpop.permute.xlu0 %2142
      %2144 = vrot.lane.b32.xlu0 %v2130, 48
      %v2145 = vpop.permute.xlu0 %2144
      %2146 = vrot.lane.b32.xlu0 %v2131, 48
      %v2147 = vpop.permute.xlu0 %2146
      %v2156 = vunpack.c.l.b16 %v1748
      %v2157 = vunpack.c.l.b16 %v1749
      %v2158 = vunpack.c.l.b16 %v1750
      %v2159 = vunpack.c.l.b16 %v1751
      %v2160 = vunpack.c.l.b16 %v1752
      %v2161 = vunpack.c.l.b16 %v1753
      %v2162 = vunpack.c.l.b16 %v1754
      %v2163 = vunpack.c.l.b16 %v1755
      %v2164 = vpack.c.b16 %v2156, %v2116
      %v2165 = vpack.c.b16 %v2157, %v2117
      %v2166 = vpack.c.b16 %v2158, %v2118
      %v2167 = vpack.c.b16 %v2159, %v2119
      %v2168 = vpack.c.b16 %v2160, %v2120
      %v2169 = vpack.c.b16 %v2161, %v2121
      %v2170 = vpack.c.b16 %v2162, %v2122
      %v2171 = vpack.c.b16 %v2163, %v2123
      %v2173 = vshrl.u32 %v2164, 16
      %v2175 = vshll.u32 %v2164, 16
      %v2177 = vrot.slane %v2175, 1
      %v2178 = vor.u32 %v2173, %v2177
      %v2180 = vshrl.u32 %v2165, 16
      %v2182 = vshll.u32 %v2165, 16
      %v2184 = vrot.slane %v2182, 1
      %v2185 = vor.u32 %v2180, %v2184
      %v2187 = vshrl.u32 %v2166, 16
      %v2189 = vshll.u32 %v2166, 16
      %v2191 = vrot.slane %v2189, 1
      %v2192 = vor.u32 %v2187, %v2191
      %v2194 = vshrl.u32 %v2167, 16
      %v2196 = vshll.u32 %v2167, 16
      %v2198 = vrot.slane %v2196, 1
      %v2199 = vor.u32 %v2194, %v2198
      %v2201 = vshrl.u32 %v2168, 16
      %v2203 = vshll.u32 %v2168, 16
      %v2205 = vrot.slane %v2203, 1
      %v2206 = vor.u32 %v2201, %v2205
      %v2208 = vshrl.u32 %v2169, 16
      %v2210 = vshll.u32 %v2169, 16
      %v2212 = vrot.slane %v2210, 1
      %v2213 = vor.u32 %v2208, %v2212
      %v2215 = vshrl.u32 %v2170, 16
      %v2217 = vshll.u32 %v2170, 16
      %v2219 = vrot.slane %v2217, 1
      %v2220 = vor.u32 %v2215, %v2219
      %v2222 = vshrl.u32 %v2171, 16
      %v2224 = vshll.u32 %v2171, 16
      %v2226 = vrot.slane %v2224, 1
      %v2227 = vor.u32 %v2222, %v2226
      %2228 = vrot.lane.b32.xlu0 %v2178, 56
      %v2229 = vpop.permute.xlu0 %2228
      %2230 = vrot.lane.b32.xlu0 %v2185, 56
      %v2231 = vpop.permute.xlu0 %2230
      %2232 = vrot.lane.b32.xlu0 %v2192, 56
      %v2233 = vpop.permute.xlu0 %2232
      %2234 = vrot.lane.b32.xlu0 %v2199, 56
      %v2235 = vpop.permute.xlu0 %2234
      %2236 = vrot.lane.b32.xlu0 %v2206, 56
      %v2237 = vpop.permute.xlu0 %2236
      %2238 = vrot.lane.b32.xlu0 %v2213, 56
      %v2239 = vpop.permute.xlu0 %2238
      %2240 = vrot.lane.b32.xlu0 %v2220, 56
      %v2241 = vpop.permute.xlu0 %2240
      %2242 = vrot.lane.b32.xlu0 %v2227, 56
      %v2243 = vpop.permute.xlu0 %2242
      %v2252 = vunpack.c.l.b16 %v1756
      %v2253 = vunpack.c.l.b16 %v1757
      %v2254 = vunpack.c.l.b16 %v1758
      %v2255 = vunpack.c.l.b16 %v1759
      %v2256 = vunpack.c.l.b16 %v1760
      %v2257 = vunpack.c.l.b16 %v1761
      %v2258 = vunpack.c.l.b16 %v1762
      %v2259 = vunpack.c.l.b16 %v1763
      %v2260 = vpack.c.b16 %v2156, %v2252
      %v2261 = vpack.c.b16 %v2157, %v2253
      %v2262 = vpack.c.b16 %v2158, %v2254
      %v2263 = vpack.c.b16 %v2159, %v2255
      %v2264 = vpack.c.b16 %v2160, %v2256
      %v2265 = vpack.c.b16 %v2161, %v2257
      %v2266 = vpack.c.b16 %v2162, %v2258
      %v2267 = vpack.c.b16 %v2163, %v2259
      %v2268 = vrot.slane %v2260, 1
      %v2269 = vrot.slane %v2261, 1
      %v2270 = vrot.slane %v2262, 1
      %v2271 = vrot.slane %v2263, 1
      %v2272 = vrot.slane %v2264, 1
      %v2273 = vrot.slane %v2265, 1
      %v2274 = vrot.slane %v2266, 1
      %v2275 = vrot.slane %v2267, 1
      %2276 = vrot.lane.b32.xlu0 %v2268, 64
      %v2277 = vpop.permute.xlu0 %2276
      %2278 = vrot.lane.b32.xlu0 %v2269, 64
      %v2279 = vpop.permute.xlu0 %2278
      %2280 = vrot.lane.b32.xlu0 %v2270, 64
      %v2281 = vpop.permute.xlu0 %2280
      %2282 = vrot.lane.b32.xlu0 %v2271, 64
      %v2283 = vpop.permute.xlu0 %2282
      %2284 = vrot.lane.b32.xlu0 %v2272, 64
      %v2285 = vpop.permute.xlu0 %2284
      %2286 = vrot.lane.b32.xlu0 %v2273, 64
      %v2287 = vpop.permute.xlu0 %2286
      %2288 = vrot.lane.b32.xlu0 %v2274, 64
      %v2289 = vpop.permute.xlu0 %2288
      %2290 = vrot.lane.b32.xlu0 %v2275, 64
      %v2291 = vpop.permute.xlu0 %2290
      %v2294 = vsel %vm1316, %v1691, %v1861
      %v2297 = vsel %vm1316, %v1692, %v1863
      %v2300 = vsel %vm1316, %v1693, %v1865
      %v2303 = vsel %vm1316, %v1694, %v1867
      %v2306 = vsel %vm1316, %v1695, %v1869
      %v2309 = vsel %vm1316, %v1696, %v1871
      %v2312 = vsel %vm1316, %v1697, %v1873
      %v2315 = vsel %vm1316, %v1698, %v1875
      %v2317 = vsel %vm1350, %v2294, %v1909
      %v2319 = vsel %vm1350, %v2297, %v1911
      %v2321 = vsel %vm1350, %v2300, %v1913
      %v2323 = vsel %vm1350, %v2303, %v1915
      %v2325 = vsel %vm1350, %v2306, %v1917
      %v2327 = vsel %vm1350, %v2309, %v1919
      %v2329 = vsel %vm1350, %v2312, %v1921
      %v2331 = vsel %vm1350, %v2315, %v1923
      %v2333 = vsel %vm1384, %v2317, %v1949
      %v2335 = vsel %vm1384, %v2319, %v1951
      %v2337 = vsel %vm1384, %v2321, %v1953
      %v2339 = vsel %vm1384, %v2323, %v1955
      %v2341 = vsel %vm1384, %v2325, %v1957
      %v2343 = vsel %vm1384, %v2327, %v1959
      %v2345 = vsel %vm1384, %v2329, %v1961
      %v2347 = vsel %vm1384, %v2331, %v1963
      %v2349 = vsel %vm1418, %v2333, %v2045
      %v2351 = vsel %vm1418, %v2335, %v2047
      %v2353 = vsel %vm1418, %v2337, %v2049
      %v2355 = vsel %vm1418, %v2339, %v2051
      %v2357 = vsel %vm1418, %v2341, %v2053
      %v2359 = vsel %vm1418, %v2343, %v2055
      %v2361 = vsel %vm1418, %v2345, %v2057
      %v2363 = vsel %vm1418, %v2347, %v2059
      %vm2364 = vcmask 326656
      %v2366 = vsel %vm2364, %v2349, %v2093
      %v2368 = vsel %vm2364, %v2351, %v2095
      %v2370 = vsel %vm2364, %v2353, %v2097
      %v2372 = vsel %vm2364, %v2355, %v2099
      %v2374 = vsel %vm2364, %v2357, %v2101
      %v2376 = vsel %vm2364, %v2359, %v2103
      %v2378 = vsel %vm2364, %v2361, %v2105
      %v2380 = vsel %vm2364, %v2363, %v2107
      %vm2381 = vcmask 392192
      %v2383 = vsel %vm2381, %v2366, %v2133
      %v2385 = vsel %vm2381, %v2368, %v2135
      %v2387 = vsel %vm2381, %v2370, %v2137
      %v2389 = vsel %vm2381, %v2372, %v2139
      %v2391 = vsel %vm2381, %v2374, %v2141
      %v2393 = vsel %vm2381, %v2376, %v2143
      %v2395 = vsel %vm2381, %v2378, %v2145
      %v2397 = vsel %vm2381, %v2380, %v2147
      %vm2398 = vcmask 457728
      %v2400 = vsel %vm2398, %v2383, %v2229
      %v2402 = vsel %vm2398, %v2385, %v2231
      %v2404 = vsel %vm2398, %v2387, %v2233
      %v2406 = vsel %vm2398, %v2389, %v2235
      %v2408 = vsel %vm2398, %v2391, %v2237
      %v2410 = vsel %vm2398, %v2393, %v2239
      %v2412 = vsel %vm2398, %v2395, %v2241
      %v2414 = vsel %vm2398, %v2397, %v2243
      %vm2415 = vcmask 523264
      %v2417 = vsel %vm2415, %v2400, %v2277
      %v2419 = vsel %vm2415, %v2402, %v2279
      %v2421 = vsel %vm2415, %v2404, %v2281
      %v2423 = vsel %vm2415, %v2406, %v2283
      %v2425 = vsel %vm2415, %v2408, %v2285
      %v2427 = vsel %vm2415, %v2410, %v2287
      %v2429 = vsel %vm2415, %v2412, %v2289
      %v2431 = vsel %vm2415, %v2414, %v2291
      %v2432 = vld [vmem:[%s4] sm:$0xf]
      %v2433 = vld [vmem:[%s4 + $0x4] sm:$0xf]
      %v2434 = vld [vmem:[%s4 + $0x8] sm:$0xf]
      %v2435 = vld [vmem:[%s4 + $0xc] sm:$0xf]
      %v2436 = vld [vmem:[%s4 + $0x10] sm:$0xf]
      %v2437 = vld [vmem:[%s4 + $0x14] sm:$0xf]
      %v2438 = vld [vmem:[%s4 + $0x18] sm:$0xf]
      %v2439 = vld [vmem:[%s4 + $0x1c] sm:$0xf]
      %v2440 = vld [vmem:[%s4 + $0x20] sm:$0xf]
      %v2449 = vunpack.c.l.b16 %v2417
      %v2450 = vunpack.c.l.b16 %v2419
      %v2451 = vunpack.c.l.b16 %v2421
      %v2452 = vunpack.c.l.b16 %v2423
      %v2453 = vunpack.c.l.b16 %v2425
      %v2454 = vunpack.c.l.b16 %v2427
      %v2455 = vunpack.c.l.b16 %v2429
      %v2456 = vunpack.c.l.b16 %v2431
      %v2457 = vpack.c.b16 %v2450, %v2449
      %v2458 = vpack.c.b16 %v2452, %v2451
      %v2459 = vpack.c.b16 %v2454, %v2453
      %v2460 = vpack.c.b16 %v2456, %v2455
      %v2470 = vunpack.c.l.b16 %v2432
      %v2471 = vunpack.c.l.b16 %v2433
      %v2472 = vunpack.c.l.b16 %v2434
      %v2473 = vunpack.c.l.b16 %v2435
      %v2474 = vunpack.c.l.b16 %v2436
      %v2475 = vunpack.c.l.b16 %v2437
      %v2476 = vunpack.c.l.b16 %v2438
      %v2477 = vunpack.c.l.b16 %v2439
      %v2478 = vunpack.c.l.b16 %v2440
      %v2479 = vpack.c.b16 %v2471, %v2470
      %v2480 = vpack.c.b16 %v2473, %v2472
      %v2481 = vpack.c.b16 %v2475, %v2474
      %v2482 = vpack.c.b16 %v2477, %v2476
      %v2483 = vpack.c.b16 %v2478, %v2478
      %vm2488 = vcmask 588800
      %v2490 = vsel %vm2488, %v2457, 0
      %v2493 = vsel %vm2488, %v2458, 0
      %v2496 = vsel %vm2488, %v2459, 0
      %v2499 = vsel %vm2488, %v2460, 0
      %vm2501 = vcmask 1043456
      %v2503 = vsel %vm2501, %v2483, 0
      %2505 = vmatpush.bf16.msra.mxu0 0
      %2506 = vmatpush.bf16.msra.mxu0 0
      %2507 = vmatpush.bf16.msra.mxu0 0
      %2508 = vmatpush.bf16.msra.mxu0 %v2503
      %2509 = vmatpush.bf16.msra.mxu0 %v2482
      %2510 = vmatpush.bf16.msra.mxu0 %v2481
      %2511 = vmatpush.bf16.msra.mxu0 %v2480
      %2512 = vmatpush.bf16.msra.mxu0 %v2479
      %2513 = vmatmul.bf16.gmra.mxu0 %v2490
      %v2514 = vpop.f32.mrf.mxu0
      %v2515 = vadd.f32 0.0, %v2514
      %v2516 = vpop.f32.mrf.mxu0
      %v2517 = vadd.f32 0.0, %v2516
      %2518 = vmatmul.bf16.gmra.mxu0 %v2493
      %v2519 = vpop.f32.mrf.mxu0
      %v2520 = vadd.f32 0.0, %v2519
      %v2521 = vpop.f32.mrf.mxu0
      %v2522 = vadd.f32 0.0, %v2521
      %2523 = vmatmul.bf16.gmra.mxu0 %v2496
      %v2524 = vpop.f32.mrf.mxu0
      %v2525 = vadd.f32 0.0, %v2524
      %v2526 = vpop.f32.mrf.mxu0
      %v2527 = vadd.f32 0.0, %v2526
      %2528 = vmatmul.bf16.gmra.mxu0 %v2499
      %v2529 = vpop.f32.mrf.mxu0
      %v2530 = vadd.f32 0.0, %v2529
      %v2531 = vpop.f32.mrf.mxu0
      %v2532 = vadd.f32 0.0, %v2531
      %2533 = vdwg.mxu0
      %v2534 = vld [vmem:[%s5] sm:$0x1]
      %v2536 = vperm.slane %v2534, 0
      %v2538 = vmul.f32 %v2515, %v2536
      %v2539 = vmul.f32 %v2517, %v2536
      %v2540 = vmul.f32 %v2520, %v2536
      %v2541 = vmul.f32 %v2522, %v2536
      %v2542 = vmul.f32 %v2525, %v2536
      %v2543 = vmul.f32 %v2527, %v2536
      %v2544 = vmul.f32 %v2530, %v2536
      %v2545 = vmul.f32 %v2532, %v2536
      %v2546 = vld [vmem:[%s6] sm:$0x1]
      %v2548 = vperm.slane %v2546, 0
      %v2550 = vadd.f32 %v2538, %v2548
      %v2551 = vadd.f32 %v2539, %v2548
      %v2552 = vadd.f32 %v2540, %v2548
      %v2553 = vadd.f32 %v2541, %v2548
      %v2554 = vadd.f32 %v2542, %v2548
      %v2555 = vadd.f32 %v2543, %v2548
      %v2556 = vadd.f32 %v2544, %v2548
      %v2557 = vadd.f32 %v2545, %v2548
      %v2558 = vmax.f32 %v2550, 0.0
      %v2559 = vmax.f32 %v2551, 0.0
      %v2560 = vmax.f32 %v2552, 0.0
      %v2561 = vmax.f32 %v2553, 0.0
      %v2562 = vmax.f32 %v2554, 0.0
      %v2563 = vmax.f32 %v2555, 0.0
      %v2564 = vmax.f32 %v2556, 0.0
      %v2565 = vmax.f32 %v2557, 0.0
      %2566 = vst.msk [vmem:[%s278] sm:$0xff] %vm1316, %v2558
      %2567 = vst.msk [vmem:[%s278 + $0x8] sm:$0xff] %vm1316, %v2559
      %2568 = vst.msk [vmem:[%s278 + $0x10] sm:$0xff] %vm1316, %v2560
      %2569 = vst.msk [vmem:[%s278 + $0x18] sm:$0xff] %vm1316, %v2561
      %2570 = vst.msk [vmem:[%s278 + $0x20] sm:$0xff] %vm1316, %v2562
      %2571 = vst.msk [vmem:[%s278 + $0x28] sm:$0xff] %vm1316, %v2563
      %2572 = vst.msk [vmem:[%s278 + $0x30] sm:$0xff] %vm1316, %v2564
      %2573 = vst.msk [vmem:[%s278 + $0x38] sm:$0xff] %vm1316, %v2565
      %p2574 = scmp.lt.s32.totalorder %s18, 1
      %s2575 = scalar_select %p2574, %s18, 1
      %s2576 = smul.addr %s2575, 8
      %s2577 = smul.addr %s2576, 8
      %s2578 = scalar_lea.vmem %s7, %s2577
      // Predicated region
      $region49: #{tpu_custom_call.1} parent=47 // pred_check
        %p2579 = pneg %p188
      $region50: #{tpu_custom_call.1} parent=47 // pred_check_branch
        %2581 = sbr.rel (%p2579) target = $region52
      $region51: #{tpu_custom_call.1} parent=47 // pred_region
        _
      $region52: #{tpu_custom_call.1} parent=47 // pred_fallthru
        _
    $region48: #{tpu_custom_call.1} parent=5 // pred_fallthru
      _
    %p2582 = scmp.le.s32.totalorder 2, %s13
    // Predicated region
    $region53: #{tpu_custom_call.1} parent=5 // pred_check
      %p2583 = pneg %p2582
    $region54: #{tpu_custom_call.1} parent=5 // pred_check_branch
      %2585 = sbr.rel (%p2583) target = $region56
    $region55: #{tpu_custom_call.1} parent=5 // pred_region
      %s2586 = ssub.s32 %s13, 2
      // Predicated region
      $region57: #{tpu_custom_call.1} parent=55 // pred_check
        %p2587 = pneg %p194
      $region58: #{tpu_custom_call.1} parent=55 // pred_check_branch
        %2589 = sbr.rel (%p2587) target = $region60
      $region59: #{tpu_custom_call.1} parent=55 // pred_region
        %p2590 = scmp.lt.s32.totalorder %s19, 1
        %s2591 = scalar_select %p2590, %s19, 1
        %s2592 = smul.addr %s2591, 8
        %s2593 = smul.addr %s2592, 8
        %s2594 = scalar_lea.vmem %s7, %s2593
      $region60: #{tpu_custom_call.1} parent=55 // pred_fallthru
        _
    $region56: #{tpu_custom_call.1} parent=5 // pred_fallthru
      _
  $region6: #{tpu_custom_call.1} parent=0 // loop_footer
    %s17 = sadd.s32 1, %s13
  $region7: #{tpu_custom_call.1} parent=0 // loop_footer_branch
    %12 = sbr.rel target = $region3
  $region8: #{tpu_custom_call.1} parent=0 // loop_exit
    _

</llo_original>
